<compile_context>
chip_gen: v7x
topology: tpu7x:2x2x1
jax: 0.10.0
libtpu: 0.0.40
codegen_flags: <defaults>
</compile_context>

<pallas_src>
import functools

import jax
import jax.numpy as jnp
from jax import lax
from jax.experimental import pallas as pl
from jax.experimental.pallas import tpu as pltpu

NEG_SLOPE = 0.01  # F.leaky_relu default
LANE = 128
SUBLANE = 8


def _leaky_relu(x):
    return jnp.where(x > 0, x, NEG_SLOPE * x)


def _round_up(n, m):
    return ((n + m - 1) // m) * m


def _pad_right(a, shape):
    pads = [(0, s - d) for d, s in zip(a.shape, shape)]
    return jnp.pad(a, pads)


def _vmem_capacity_bytes():
    try:
        return int(pltpu.get_tpu_info().vmem_capacity_bytes)
    except Exception:
        return 64 * 1024 * 1024  # conservative (v7x per-TC VMEM)


# ----------------------------- kernel ---------------------------------------
def reccritic_kernel(x_ref, h0_ref,
                     w1_ref, b1_ref,
                     wih_ref, gib_ref, whh_ref, bhhn_ref,
                     w2_ref, b2_ref, wo_ref,
                     v_ref, hT_ref,
                     h_scr, gi_scr, hseq_scr,
                     *, true_T, mask_tail, unroll):
    t_idx = pl.program_id(1)
    Tc, Bc, Osub = x_ref.shape
    Hp = h0_ref.shape[-1]

    # -- init carried hidden state at the start of this batch-chunk's sweep --
    @pl.when(t_idx == 0)
    def _():
        h_scr[...] = h0_ref[...]

    # -- hidden_1 + leaky_relu for the whole chunk (one MXU pass, K = o_size) --
    # Bc % 8 == 0, so collapsing the leading dims is a tile-aligned no-op.
    x2d = x_ref[...].reshape(Tc * Bc, Osub)
    a1 = jnp.dot(x2d, w1_ref[...], preferred_element_type=jnp.float32) + b1_ref[...]
    a1 = _leaky_relu(a1)

    # -- GRU input-side gate projections for the whole chunk (off the serial
    #    critical path); r/z hidden biases are pre-folded into gib in the wrapper.
    gi = jnp.dot(a1.astype(wih_ref.dtype), wih_ref[...],
                 preferred_element_type=jnp.float32) + gib_ref[...]
    gi_scr[...] = gi.reshape(Tc, Bc, 3 * Hp)

    # -- recurrent GRU loop (PyTorch gate order r, z, n) --
    whh = whh_ref[...]                                        # hoisted weight load
    bhh_n = jnp.broadcast_to(bhhn_ref[...], (Bc, Hp))         # hoisted broadcast
    chunk_start = t_idx * Tc

    def step(t, h):
        gh = jnp.dot(h.astype(whh.dtype), whh, preferred_element_type=jnp.float32)
        gi_t = gi_scr[t]                                      # (Bc, 3*Hp)
        # Hp is a multiple of 128 -> these lane slices are full aligned tiles.
        r = jax.nn.sigmoid(gi_t[:, :Hp] + gh[:, :Hp])
        z = jax.nn.sigmoid(gi_t[:, Hp:2 * Hp] + gh[:, Hp:2 * Hp])
        n = jnp.tanh(gi_t[:, 2 * Hp:] + r * (gh[:, 2 * Hp:] + bhh_n))
        h_new = (1.0 - z) * n + z * h
        if mask_tail:
            # padded time steps (T padded up to a multiple of Tc): carry h through
            h_new = jnp.where(chunk_start + t < true_T, h_new, h)
        hseq_scr[t] = h_new.astype(hseq_scr.dtype)
        return h_new

    h_fin = lax.fori_loop(0, Tc, step, h_scr[...], unroll=unroll)
    h_scr[...] = h_fin

    @pl.when(t_idx == pl.num_programs(1) - 1)
    def _():
        hT_ref[...] = h_fin

    # -- hidden_2 + leaky_relu, then value head as VPU mul + lane reduce --
    seq = hseq_scr[...].reshape(Tc * Bc, Hp)                  # already matmul dtype
    a2 = jnp.dot(seq, w2_ref[...], preferred_element_type=jnp.float32) + b2_ref[...]
    a2 = _leaky_relu(a2)
    wo = wo_ref[...].astype(jnp.float32)                      # (1, Hp)
    v = jnp.sum(a2.reshape(Tc, Bc, Hp) * wo[None], axis=-1)   # (Tc, Bc)
    v_ref[...] = v.reshape(1, 1, Tc, Bc)


# ----------------------------- wrapper ---------------------------------------
@functools.partial(jax.jit, static_argnames=("compute_dtype", "tc_max",
                                              "batch_chunks", "recurrent_f32"))
def rec_critic_forward(x, h, params, *, compute_dtype=jnp.float32, tc_max=64,
                       batch_chunks=None, recurrent_f32=False):
    """x: (B, T, o_size) batch-first; h: (1, B, h_size) or None.
    Returns (v: (B, T, 1) f32, h_T: (1, B, h_size) f32)."""
    B, T, O = x.shape
    H = params["w1"].shape[1]
    f32 = jnp.float32
    csize = jnp.dtype(compute_dtype).itemsize

    Bp = _round_up(B, SUBLANE)
    Hp = _round_up(H, LANE)
    Osub = _round_up(O, SUBLANE)   # sublane-align only; x keeps its true lane width

    # Batch chunks: only split when each half stays sublane-efficient (big B);
    # the leading grid axis is "parallel" so multi-TC chips (v7x) can shard it,
    # while small batches avoid pointless extra grid steps on 1-TC chips.
    if batch_chunks is None:
        n_b = 2 if (Bp >= 256 and Bp % (2 * SUBLANE) == 0) else 1
    else:
        n_b = max(1, int(batch_chunks))
        if Bp % (n_b * SUBLANE) != 0:
            n_b = 1
    Bc = Bp // n_b

    # ---- generation-aware VMEM budget -> time-chunk size -----------------
    cap = _vmem_capacity_bytes()
    budget = (cap * 3) // 4                      # leave 25% for compiler scratch

    def vmem_est(tc):
        wbytes = 2 * (Osub * Hp + 7 * Hp * Hp) * csize     # resident weights (x2: pipeline bufs)
        xbytes = 2 * tc * Bc * Osub * csize                # double-buffered x chunk
        gib = tc * Bc * 3 * Hp * 4                         # gi scratch (f32)
        hsq = tc * Bc * Hp * csize                         # GRU outputs (compute dtype)
        other = 2 * tc * Bc * 4 + 3 * Bc * Hp * 4          # v out, h_T out, carried h
        return wbytes + xbytes + gib + hsq + other + (2 << 20)

    tc_fit = 1
    for c in range(max(1, min(tc_max, T)), 0, -1):
        if vmem_est(c) <= budget:
            tc_fit = c
            break
    Tc = tc_fit
    # prefer an exact divisor of T near the fitted value (no padded steps)
    for c in range(Tc, max(1, (3 * Tc) // 4) - 1, -1):
        if T % c == 0:
            Tc = c
            break
    T_pad = _round_up(T, Tc)
    n_t = T_pad // Tc
    mask_tail = (T_pad != T)
    vmem_limit = int(min(budget, max(32 << 20, int(vmem_est(Tc) * 1.3) + (4 << 20))))

    # unroll factor gated on per-step vreg footprint (~10 live (Bc,Hp) f32 tiles)
    vregs_per_step = 10 * ((Bc + SUBLANE - 1) // SUBLANE) * ((Hp + LANE - 1) // LANE)
    if 4 * vregs_per_step <= 48:
        unroll = True if Tc <= 8 else 4
    elif 2 * vregs_per_step <= 48:
        unroll = 2
    else:
        unroll = 1

    # ---- lay out operands (cast first, time-major x, gate-wise padded GRU weights)
    x_tm = jnp.transpose(x.astype(compute_dtype), (1, 0, 2))         # (T, B, O)
    x_p = _pad_right(x_tm, (T_pad, Bp, Osub))

    h0 = jnp.zeros((B, H), f32) if h is None else h[0].astype(f32)
    h0_p = _pad_right(h0, (Bp, Hp))

    w1_p = _pad_right(params["w1"].astype(f32), (Osub, Hp)).astype(compute_dtype)
    b1_p = _pad_right(params["b1"].astype(f32), (1, Hp))

    rec_dtype = f32 if recurrent_f32 else compute_dtype
    # pad each gate block separately so gate k occupies lanes [k*Hp, (k+1)*Hp)
    wih_g = jnp.split(params["wih"].astype(f32), 3, axis=1)
    whh_g = jnp.split(params["whh"].astype(f32), 3, axis=1)
    bih_g = jnp.split(params["bih"].astype(f32), 3, axis=1)
    bhh_g = jnp.split(params["bhh"].astype(f32), 3, axis=1)
    wih_p = jnp.concatenate([_pad_right(g, (Hp, Hp)) for g in wih_g],
                            axis=1).astype(compute_dtype)
    whh_p = jnp.concatenate([_pad_right(g, (Hp, Hp)) for g in whh_g],
                            axis=1).astype(rec_dtype)
    # fold r/z hidden biases into the input-side bias (added once per chunk);
    # only the n-gate hidden bias is needed inside the recurrence.
    gib_p = jnp.concatenate([_pad_right(bih_g[0] + bhh_g[0], (1, Hp)),
                             _pad_right(bih_g[1] + bhh_g[1], (1, Hp)),
                             _pad_right(bih_g[2], (1, Hp))], axis=1)
    bhhn_p = _pad_right(bhh_g[2], (1, Hp))

    w2_p = _pad_right(params["w2"].astype(f32), (Hp, Hp)).astype(compute_dtype)
    b2_p = _pad_right(params["b2"].astype(f32), (1, Hp))
    wo_p = _pad_right(params["wo"].astype(f32).T, (1, Hp))            # (1, Hp), f32

    grid_spec = pltpu.PrefetchScalarGridSpec(
        num_scalar_prefetch=0,
        grid=(n_b, n_t),
        in_specs=[
            pl.BlockSpec((Tc, Bc, Osub), lambda b, t: (t, b, 0)),     # x chunk (true O width)
            pl.BlockSpec((Bc, Hp), lambda b, t: (b, 0)),              # h0 chunk
            pl.BlockSpec((Osub, Hp), lambda b, t: (0, 0)),            # w1
            pl.BlockSpec((1, Hp), lambda b, t: (0, 0)),               # b1
            pl.BlockSpec((Hp, 3 * Hp), lambda b, t: (0, 0)),          # W_ih (r|z|n)
            pl.BlockSpec((1, 3 * Hp), lambda b, t: (0, 0)),           # folded gi bias
            pl.BlockSpec((Hp, 3 * Hp), lambda b, t: (0, 0)),          # W_hh (r|z|n)
            pl.BlockSpec((1, Hp), lambda b, t: (0, 0)),               # b_hn
            pl.BlockSpec((Hp, Hp), lambda b, t: (0, 0)),              # w2
            pl.BlockSpec((1, Hp), lambda b, t: (0, 0)),               # b2
            pl.BlockSpec((1, Hp), lambda b, t: (0, 0)),               # wo row
        ],
        out_specs=(
            pl.BlockSpec((1, 1, Tc, Bc), lambda b, t: (b, t, 0, 0)),  # v chunk
            pl.BlockSpec((Bc, Hp), lambda b, t: (b, 0)),              # h_T (resident)
        ),
        scratch_shapes=[
            pltpu.VMEM((Bc, Hp), f32),                     # carried hidden state (f32)
            pltpu.VMEM((Tc, Bc, 3 * Hp), f32),             # per-chunk gate projections (f32)
            pltpu.VMEM((Tc, Bc, Hp), compute_dtype),       # per-chunk GRU outputs (matmul dtype)
        ],
    )

    kernel = functools.partial(reccritic_kernel, true_T=T, mask_tail=mask_tail,
                               unroll=unroll)

    v_pad, hT_pad = pl.pallas_call(
        kernel,
        out_shape=(jax.ShapeDtypeStruct((n_b, n_t, Tc, Bc), f32),
                   jax.ShapeDtypeStruct((Bp, Hp), f32)),
        grid_spec=grid_spec,
        compiler_params=pltpu.CompilerParams(
            dimension_semantics=(pltpu.PARALLEL, pltpu.ARBITRARY),
            vmem_limit_bytes=vmem_limit,
        ),
    )(x_p, h0_p, w1_p, b1_p, wih_p, gib_p, whh_p, bhhn_p, w2_p, b2_p, wo_p)

    # un-pad / re-layout: (n_b, n_t, Tc, Bc) -> (B, T, 1); scalar output bias here.
    v_bt = jnp.transpose(v_pad.reshape(n_b, T_pad, Bc), (1, 0, 2)).reshape(T_pad, Bp)
    v = jnp.transpose(v_bt[:T])[:B][:, :, None] + params["bo"][0, 0]
    hT = hT_pad[:B, :H][None]
    return v, hT


# ---------------- deterministic parameter init (matches module shapes) -------
def _xavier_uniform(key, fan_in, fan_out, gain):
    bound = gain * jnp.sqrt(6.0 / (fan_in + fan_out))
    # stored as (in, out) so the kernel right-multiplies
    return jax.random.uniform(key, (fan_in, fan_out), jnp.float32, -bound, bound)


def init_params(key, o_size, h_size):
    ks = jax.random.split(key, 8)
    gain_tanh = 5.0 / 3.0
    k_gru = 1.0 / jnp.sqrt(h_size)
    return {
        "w1": _xavier_uniform(ks[0], o_size, h_size, gain_tanh),
        "b1": jnp.zeros((1, h_size), jnp.float32),
        "wih": jax.random.uniform(ks[1], (h_size, 3 * h_size), jnp.float32, -k_gru, k_gru),
        "whh": jax.random.uniform(ks[2], (h_size, 3 * h_size), jnp.float32, -k_gru, k_gru),
        "bih": jax.random.uniform(ks[3], (1, 3 * h_size), jnp.float32, -k_gru, k_gru),
        "bhh": jax.random.uniform(ks[4], (1, 3 * h_size), jnp.float32, -k_gru, k_gru),
        "w2": _xavier_uniform(ks[5], h_size, h_size, gain_tanh),
        "b2": jnp.zeros((1, h_size), jnp.float32),
        "wo": _xavier_uniform(ks[6], h_size, 1, 1.0),
        "bo": jnp.zeros((1, 1), jnp.float32),
    }


# ---------------- pure-JAX reference for verification ------------------------
def rec_critic_reference(x, h, p):
    B, T, O = x.shape
    H = p["w1"].shape[1]
    a1 = _leaky_relu(jnp.einsum("bto,oh->bth", x, p["w1"]) + p["b1"][0])
    hcur = jnp.zeros((B, H), jnp.float32) if h is None else h[0]
    outs = []
    for t in range(T):
        gi = a1[:, t] @ p["wih"] + p["bih"][0]
        gh = hcur @ p["whh"] + p["bhh"][0]
        r = jax.nn.sigmoid(gi[:, :H] + gh[:, :H])
        z = jax.nn.sigmoid(gi[:, H:2 * H] + gh[:, H:2 * H])
        n = jnp.tanh(gi[:, 2 * H:] + r * gh[:, 2 * H:])
        hcur = (1.0 - z) * n + z * hcur
        outs.append(hcur)
    seq = jnp.stack(outs, axis=1)                                  # (B, T, H)
    a2 = _leaky_relu(jnp.einsum("bth,hk->btk", seq, p["w2"]) + p["b2"][0])
    v = jnp.einsum("bth,ho->bto", a2, p["wo"]) + p["bo"][0]
    return v, hcur[None]


if __name__ == "__main__":
    B, T, O, H = 2, 8, 16, 32
    key = jax.random.PRNGKey(0)
    k_param, k_x, k_h, k_x2, k_h2 = jax.random.split(key, 5)

    params = init_params(k_param, O, H)
    x = jax.random.normal(k_x, (B, T, O), jnp.float32)
    h0 = jax.random.normal(k_h, (1, B, H), jnp.float32)

    v_ref, h_ref = rec_critic_reference(x, h0, params)

    # f32 run, multi time-chunk (tc_max=4 -> 2 chunks) to exercise the carried
    # hidden-state scratch across grid steps; strict check vs. pure-JAX reference.
    v, h_T = rec_critic_forward(x, h0, params, tc_max=4)
    jax.block_until_ready((v, h_T))
    assert v.shape == (B, T, 1) and h_T.shape == (1, B, H)
    assert jnp.allclose(v, v_ref, rtol=1e-4, atol=1e-4)
    assert jnp.allclose(h_T, h_ref, rtol=1e-4, atol=1e-4)

    # h=None path (zeros initial state), default single chunk.
    v0, hT0 = rec_critic_forward(x, None, params)
    v0_ref, h0_ref = rec_critic_reference(x, None, params)
    jax.block_until_ready((v0, hT0))
    assert jnp.allclose(v0, v0_ref, rtol=1e-4, atol=1e-4)
    assert jnp.allclose(hT0, h0_ref, rtol=1e-4, atol=1e-4)

    # Awkward sequence length (T=7, tc_max=4 -> Tc=4, T padded to 8 with the
    # in-kernel carry-through mask on the padded steps).
    T2 = 7
    x2 = jax.random.normal(k_x2, (B, T2, O), jnp.float32)
    h2 = jax.random.normal(k_h2, (1, B, H), jnp.float32)
    v2_ref, h2_ref = rec_critic_reference(x2, h2, params)
    v2, hT2 = rec_critic_forward(x2, h2, params, tc_max=4)
    jax.block_until_ready((v2, hT2))
    assert v2.shape == (B, T2, 1)
    assert jnp.allclose(v2, v2_ref, rtol=1e-4, atol=1e-4)
    assert jnp.allclose(hT2, h2_ref, rtol=1e-4, atol=1e-4)

    # bf16 matmul inputs (MXU-native rate); gates / hidden carry stay f32, so
    # only matmul rounding differs -> loose tolerance.  (recurrent_f32=True keeps
    # the per-step W_hh matmul in f32 when drift over long T matters.)
    v_bf, h_bf = rec_critic_forward(x, h0, params, compute_dtype=jnp.bfloat16)
    jax.block_until_ready((v_bf, h_bf))
    assert jnp.all(jnp.isfinite(v_bf))
    assert jnp.allclose(v_bf, v_ref, rtol=1e-1, atol=1e-1)
    assert jnp.allclose(h_bf, h_ref, rtol=1e-1, atol=1e-1)

    print("KERNEL_OK")
</pallas_src>

<mosaic_0001>
module attributes {stable_mosaic.version = 11 : i64} {
  func.func @reccritic_kernel(%arg0: i32, %arg1: i32, %arg2: memref<4x8x16xf32, #tpu.memory_space<vmem>>, %arg3: memref<8x128xf32, #tpu.memory_space<vmem>>, %arg4: memref<16x128xf32, #tpu.memory_space<vmem>>, %arg5: memref<1x128xf32, #tpu.memory_space<vmem>>, %arg6: memref<128x384xf32, #tpu.memory_space<vmem>>, %arg7: memref<1x384xf32, #tpu.memory_space<vmem>>, %arg8: memref<128x384xf32, #tpu.memory_space<vmem>>, %arg9: memref<1x128xf32, #tpu.memory_space<vmem>>, %arg10: memref<128x128xf32, #tpu.memory_space<vmem>>, %arg11: memref<1x128xf32, #tpu.memory_space<vmem>>, %arg12: memref<1x128xf32, #tpu.memory_space<vmem>>, %arg13: memref<1x1x4x8xf32, #tpu.memory_space<vmem>>, %arg14: memref<8x128xf32, #tpu.memory_space<vmem>>, %arg15: memref<8x128xf32, #tpu.memory_space<vmem>>, %arg16: memref<4x8x384xf32, #tpu.memory_space<vmem>>, %arg17: memref<4x8x128xf32, #tpu.memory_space<vmem>>) attributes {dimension_semantics = [#tpu.dimension_semantics<parallel>, #tpu.dimension_semantics<arbitrary>], iteration_bounds = array<i64: 1, 2>, scalar_prefetch = 0 : i64, scratch_operands = 3 : i64, tpu.core_type = #tpu.core_type<tc>, window_params = [{transform_indices = @transform_0, window_bounds = array<i64: 4, 8, 16>}, {transform_indices = @transform_1, window_bounds = array<i64: 8, 128>}, {pipeline_mode = #tpu.pipeline_mode<synchronous>, transform_indices = @transform_2, window_bounds = array<i64: 16, 128>}, {pipeline_mode = #tpu.pipeline_mode<synchronous>, transform_indices = @transform_3, window_bounds = array<i64: 1, 128>}, {pipeline_mode = #tpu.pipeline_mode<synchronous>, transform_indices = @transform_4, window_bounds = array<i64: 128, 384>}, {pipeline_mode = #tpu.pipeline_mode<synchronous>, transform_indices = @transform_5, window_bounds = array<i64: 1, 384>}, {pipeline_mode = #tpu.pipeline_mode<synchronous>, transform_indices = @transform_6, window_bounds = array<i64: 128, 384>}, {pipeline_mode = #tpu.pipeline_mode<synchronous>, transform_indices = @transform_7, window_bounds = array<i64: 1, 128>}, {pipeline_mode = #tpu.pipeline_mode<synchronous>, transform_indices = @transform_8, window_bounds = array<i64: 128, 128>}, {pipeline_mode = #tpu.pipeline_mode<synchronous>, transform_indices = @transform_9, window_bounds = array<i64: 1, 128>}, {pipeline_mode = #tpu.pipeline_mode<synchronous>, transform_indices = @transform_10, window_bounds = array<i64: 1, 128>}, {transform_indices = @transform_11, window_bounds = array<i64: 1, 1, 4, 8>}, {transform_indices = @transform_12, window_bounds = array<i64: 8, 128>}]} {
    %c0_i32 = arith.constant 0 : i32
    %0 = arith.cmpi eq, %arg1, %c0_i32 : i32
    %1 = arith.extui %0 : i1 to i32
    %c0_i32_0 = arith.constant 0 : i32
    %2 = arith.cmpi ne, %1, %c0_i32_0 : i32
    scf.if %2 {
      %c0_77 = arith.constant 0 : index
      %c0_78 = arith.constant 0 : index
      %191 = vector.load %arg3[%c0_77, %c0_78] : memref<8x128xf32, #tpu.memory_space<vmem>>, vector<8x128xf32>
      %c0_79 = arith.constant 0 : index
      %c0_80 = arith.constant 0 : index
      %192 = vector.load %arg15[%c0_79, %c0_80] : memref<8x128xf32, #tpu.memory_space<vmem>>, vector<8x128xf32>
      tpu.vector_store %arg15[%c0_79, %c0_80], %191 {strides = array<i32>} : memref<8x128xf32, #tpu.memory_space<vmem>>, vector<8x128xf32>,
    } else {
    }
    %c0 = arith.constant 0 : index
    %c0_1 = arith.constant 0 : index
    %c0_2 = arith.constant 0 : index
    %3 = vector.load %arg2[%c0, %c0_1, %c0_2] : memref<4x8x16xf32, #tpu.memory_space<vmem>>, vector<4x8x16xf32>
    %4 = vector.shape_cast %3 : vector<4x8x16xf32> to vector<32x16xf32>
    %c0_3 = arith.constant 0 : index
    %c0_4 = arith.constant 0 : index
    %5 = vector.load %arg4[%c0_3, %c0_4] : memref<16x128xf32, #tpu.memory_space<vmem>>, vector<16x128xf32>
    %cst = arith.constant dense<0.000000e+00> : vector<32x128xf32>
    %6 = tpu.matmul %4, %5, %cst {dimension_numbers = #tpu.dot_dimension_numbers<[1], [0], [0], [1], [0, 0, 1, 1], [], []>} : vector<32x16xf32>, vector<16x128xf32>, vector<32x128xf32> -> vector<32x128xf32>
    %c0_5 = arith.constant 0 : index
    %c0_6 = arith.constant 0 : index
    %7 = vector.load %arg5[%c0_5, %c0_6] : memref<1x128xf32, #tpu.memory_space<vmem>>, vector<1x128xf32>
    %8 = vector.broadcast %7 : vector<1x128xf32> to vector<32x128xf32>
    %9 = arith.addf %6, %8 : vector<32x128xf32>
    %cst_7 = arith.constant 0.000000e+00 : f32
    %10 = vector.broadcast %cst_7 : f32 to vector<32x128xf32>
    %11 = arith.cmpf ogt, %9, %10 : vector<32x128xf32>
    %cst_8 = arith.constant 0.00999999977 : f32
    %12 = vector.broadcast %cst_8 : f32 to vector<32x128xf32>
    %13 = arith.mulf %12, %9 : vector<32x128xf32>
    %14 = arith.select %11, %9, %13 : vector<32x128xi1>, vector<32x128xf32>
    %c0_9 = arith.constant 0 : index
    %c0_10 = arith.constant 0 : index
    %15 = vector.load %arg6[%c0_9, %c0_10] : memref<128x384xf32, #tpu.memory_space<vmem>>, vector<128x384xf32>
    %cst_11 = arith.constant dense<0.000000e+00> : vector<32x384xf32>
    %16 = tpu.matmul %14, %15, %cst_11 {dimension_numbers = #tpu.dot_dimension_numbers<[1], [0], [0], [1], [0, 0, 1, 1], [], []>} : vector<32x128xf32>, vector<128x384xf32>, vector<32x384xf32> -> vector<32x384xf32>
    %c0_12 = arith.constant 0 : index
    %c0_13 = arith.constant 0 : index
    %17 = vector.load %arg7[%c0_12, %c0_13] : memref<1x384xf32, #tpu.memory_space<vmem>>, vector<1x384xf32>
    %18 = vector.broadcast %17 : vector<1x384xf32> to vector<32x384xf32>
    %19 = arith.addf %16, %18 : vector<32x384xf32>
    %20 = vector.shape_cast %19 : vector<32x384xf32> to vector<4x8x384xf32>
    %c0_14 = arith.constant 0 : index
    %c0_15 = arith.constant 0 : index
    %c0_16 = arith.constant 0 : index
    %21 = vector.load %arg16[%c0_14, %c0_15, %c0_16] : memref<4x8x384xf32, #tpu.memory_space<vmem>>, vector<4x8x384xf32>
    tpu.vector_store %arg16[%c0_14, %c0_15, %c0_16], %20 {strides = array<i32>} : memref<4x8x384xf32, #tpu.memory_space<vmem>>, vector<4x8x384xf32>,
    %c0_17 = arith.constant 0 : index
    %c0_18 = arith.constant 0 : index
    %22 = vector.load %arg8[%c0_17, %c0_18] : memref<128x384xf32, #tpu.memory_space<vmem>>, vector<128x384xf32>
    %c0_19 = arith.constant 0 : index
    %c0_20 = arith.constant 0 : index
    %23 = vector.load %arg9[%c0_19, %c0_20] : memref<1x128xf32, #tpu.memory_space<vmem>>, vector<1x128xf32>
    %24 = vector.shape_cast %23 : vector<1x128xf32> to vector<1x128xf32>
    %25 = vector.broadcast %24 : vector<1x128xf32> to vector<8x128xf32>
    %c0_21 = arith.constant 0 : index
    %c0_22 = arith.constant 0 : index
    %26 = vector.load %arg15[%c0_21, %c0_22] : memref<8x128xf32, #tpu.memory_space<vmem>>, vector<8x128xf32>
    %c0_i32_23 = arith.constant 0 : i32
    %cst_24 = arith.constant dense<0.000000e+00> : vector<8x384xf32>
    %27 = tpu.matmul %26, %22, %cst_24 {dimension_numbers = #tpu.dot_dimension_numbers<[1], [0], [0], [1], [0, 0, 1, 1], [], []>} : vector<8x128xf32>, vector<128x384xf32>, vector<8x384xf32> -> vector<8x384xf32>
    %28 = arith.index_cast %c0_i32_23 : i32 to index
    %c0_25 = arith.constant 0 : index
    %c0_26 = arith.constant 0 : index
    %29 = vector.load %arg16[%28, %c0_25, %c0_26] : memref<4x8x384xf32, #tpu.memory_space<vmem>>, vector<1x8x384xf32>
    %30 = vector.shape_cast %29 : vector<1x8x384xf32> to vector<8x384xf32>
    %31 = vector.extract_strided_slice %30 {offsets = [0, 0], sizes = [8, 128], strides = [1, 1]} : vector<8x384xf32> to vector<8x128xf32>
    %32 = vector.extract_strided_slice %27 {offsets = [0, 0], sizes = [8, 128], strides = [1, 1]} : vector<8x384xf32> to vector<8x128xf32>
    %33 = arith.addf %31, %32 : vector<8x128xf32>
    %34 = arith.negf %33 : vector<8x128xf32>
    %35 = math.exp %34 : vector<8x128xf32>
    %cst_27 = arith.constant 1.000000e+00 : f32
    %36 = vector.broadcast %cst_27 : f32 to vector<8x128xf32>
    %37 = arith.addf %36, %35 : vector<8x128xf32>
    %38 = arith.divf %36, %37 : vector<8x128xf32>
    %39 = vector.extract_strided_slice %30 {offsets = [0, 128], sizes = [8, 128], strides = [1, 1]} : vector<8x384xf32> to vector<8x128xf32>
    %40 = vector.extract_strided_slice %27 {offsets = [0, 128], sizes = [8, 128], strides = [1, 1]} : vector<8x384xf32> to vector<8x128xf32>
    %41 = arith.addf %39, %40 : vector<8x128xf32>
    %42 = arith.negf %41 : vector<8x128xf32>
    %43 = math.exp %42 : vector<8x128xf32>
    %cst_28 = arith.constant 1.000000e+00 : f32
    %44 = vector.broadcast %cst_28 : f32 to vector<8x128xf32>
    %45 = arith.addf %44, %43 : vector<8x128xf32>
    %46 = arith.divf %44, %45 : vector<8x128xf32>
    %47 = vector.extract_strided_slice %30 {offsets = [0, 256], sizes = [8, 128], strides = [1, 1]} : vector<8x384xf32> to vector<8x128xf32>
    %48 = vector.extract_strided_slice %27 {offsets = [0, 256], sizes = [8, 128], strides = [1, 1]} : vector<8x384xf32> to vector<8x128xf32>
    %49 = arith.addf %48, %25 : vector<8x128xf32>
    %50 = arith.mulf %38, %49 : vector<8x128xf32>
    %51 = arith.addf %47, %50 : vector<8x128xf32>
    %52 = math.tanh %51 : vector<8x128xf32>
    %cst_29 = arith.constant 1.000000e+00 : f32
    %53 = vector.broadcast %cst_29 : f32 to vector<8x128xf32>
    %54 = arith.subf %53, %46 : vector<8x128xf32>
    %55 = arith.mulf %54, %52 : vector<8x128xf32>
    %56 = arith.mulf %46, %26 : vector<8x128xf32>
    %57 = arith.addf %55, %56 : vector<8x128xf32>
    %58 = arith.index_cast %c0_i32_23 : i32 to index
    %c0_30 = arith.constant 0 : index
    %c0_31 = arith.constant 0 : index
    %59 = vector.load %arg17[%58, %c0_30, %c0_31] : memref<4x8x128xf32, #tpu.memory_space<vmem>>, vector<1x8x128xf32>
    %60 = vector.shape_cast %59 : vector<1x8x128xf32> to vector<8x128xf32>
    %61 = vector.shape_cast %57 : vector<8x128xf32> to vector<1x8x128xf32>
    tpu.vector_store %arg17[%58, %c0_30, %c0_31], %61 {strides = array<i32>} : memref<4x8x128xf32, #tpu.memory_space<vmem>>, vector<1x8x128xf32>,
    %c1_i32 = arith.constant 1 : i32
    %cst_32 = arith.constant dense<0.000000e+00> : vector<8x384xf32>
    %62 = tpu.matmul %57, %22, %cst_32 {dimension_numbers = #tpu.dot_dimension_numbers<[1], [0], [0], [1], [0, 0, 1, 1], [], []>} : vector<8x128xf32>, vector<128x384xf32>, vector<8x384xf32> -> vector<8x384xf32>
    %63 = arith.index_cast %c1_i32 : i32 to index
    %c0_33 = arith.constant 0 : index
    %c0_34 = arith.constant 0 : index
    %64 = vector.load %arg16[%63, %c0_33, %c0_34] : memref<4x8x384xf32, #tpu.memory_space<vmem>>, vector<1x8x384xf32>
    %65 = vector.shape_cast %64 : vector<1x8x384xf32> to vector<8x384xf32>
    %66 = vector.extract_strided_slice %65 {offsets = [0, 0], sizes = [8, 128], strides = [1, 1]} : vector<8x384xf32> to vector<8x128xf32>
    %67 = vector.extract_strided_slice %62 {offsets = [0, 0], sizes = [8, 128], strides = [1, 1]} : vector<8x384xf32> to vector<8x128xf32>
    %68 = arith.addf %66, %67 : vector<8x128xf32>
    %69 = arith.negf %68 : vector<8x128xf32>
    %70 = math.exp %69 : vector<8x128xf32>
    %cst_35 = arith.constant 1.000000e+00 : f32
    %71 = vector.broadcast %cst_35 : f32 to vector<8x128xf32>
    %72 = arith.addf %71, %70 : vector<8x128xf32>
    %73 = arith.divf %71, %72 : vector<8x128xf32>
    %74 = vector.extract_strided_slice %65 {offsets = [0, 128], sizes = [8, 128], strides = [1, 1]} : vector<8x384xf32> to vector<8x128xf32>
    %75 = vector.extract_strided_slice %62 {offsets = [0, 128], sizes = [8, 128], strides = [1, 1]} : vector<8x384xf32> to vector<8x128xf32>
    %76 = arith.addf %74, %75 : vector<8x128xf32>
    %77 = arith.negf %76 : vector<8x128xf32>
    %78 = math.exp %77 : vector<8x128xf32>
    %cst_36 = arith.constant 1.000000e+00 : f32
    %79 = vector.broadcast %cst_36 : f32 to vector<8x128xf32>
    %80 = arith.addf %79, %78 : vector<8x128xf32>
    %81 = arith.divf %79, %80 : vector<8x128xf32>
    %82 = vector.extract_strided_slice %65 {offsets = [0, 256], sizes = [8, 128], strides = [1, 1]} : vector<8x384xf32> to vector<8x128xf32>
    %83 = vector.extract_strided_slice %62 {offsets = [0, 256], sizes = [8, 128], strides = [1, 1]} : vector<8x384xf32> to vector<8x128xf32>
    %84 = arith.addf %83, %25 : vector<8x128xf32>
    %85 = arith.mulf %73, %84 : vector<8x128xf32>
    %86 = arith.addf %82, %85 : vector<8x128xf32>
    %87 = math.tanh %86 : vector<8x128xf32>
    %cst_37 = arith.constant 1.000000e+00 : f32
    %88 = vector.broadcast %cst_37 : f32 to vector<8x128xf32>
    %89 = arith.subf %88, %81 : vector<8x128xf32>
    %90 = arith.mulf %89, %87 : vector<8x128xf32>
    %91 = arith.mulf %81, %57 : vector<8x128xf32>
    %92 = arith.addf %90, %91 : vector<8x128xf32>
    %93 = arith.index_cast %c1_i32 : i32 to index
    %c0_38 = arith.constant 0 : index
    %c0_39 = arith.constant 0 : index
    %94 = vector.load %arg17[%93, %c0_38, %c0_39] : memref<4x8x128xf32, #tpu.memory_space<vmem>>, vector<1x8x128xf32>
    %95 = vector.shape_cast %94 : vector<1x8x128xf32> to vector<8x128xf32>
    %96 = vector.shape_cast %92 : vector<8x128xf32> to vector<1x8x128xf32>
    tpu.vector_store %arg17[%93, %c0_38, %c0_39], %96 {strides = array<i32>} : memref<4x8x128xf32, #tpu.memory_space<vmem>>, vector<1x8x128xf32>,
    %c2_i32 = arith.constant 2 : i32
    %cst_40 = arith.constant dense<0.000000e+00> : vector<8x384xf32>
    %97 = tpu.matmul %92, %22, %cst_40 {dimension_numbers = #tpu.dot_dimension_numbers<[1], [0], [0], [1], [0, 0, 1, 1], [], []>} : vector<8x128xf32>, vector<128x384xf32>, vector<8x384xf32> -> vector<8x384xf32>
    %98 = arith.index_cast %c2_i32 : i32 to index
    %c0_41 = arith.constant 0 : index
    %c0_42 = arith.constant 0 : index
    %99 = vector.load %arg16[%98, %c0_41, %c0_42] : memref<4x8x384xf32, #tpu.memory_space<vmem>>, vector<1x8x384xf32>
    %100 = vector.shape_cast %99 : vector<1x8x384xf32> to vector<8x384xf32>
    %101 = vector.extract_strided_slice %100 {offsets = [0, 0], sizes = [8, 128], strides = [1, 1]} : vector<8x384xf32> to vector<8x128xf32>
    %102 = vector.extract_strided_slice %97 {offsets = [0, 0], sizes = [8, 128], strides = [1, 1]} : vector<8x384xf32> to vector<8x128xf32>
    %103 = arith.addf %101, %102 : vector<8x128xf32>
    %104 = arith.negf %103 : vector<8x128xf32>
    %105 = math.exp %104 : vector<8x128xf32>
    %cst_43 = arith.constant 1.000000e+00 : f32
    %106 = vector.broadcast %cst_43 : f32 to vector<8x128xf32>
    %107 = arith.addf %106, %105 : vector<8x128xf32>
    %108 = arith.divf %106, %107 : vector<8x128xf32>
    %109 = vector.extract_strided_slice %100 {offsets = [0, 128], sizes = [8, 128], strides = [1, 1]} : vector<8x384xf32> to vector<8x128xf32>
    %110 = vector.extract_strided_slice %97 {offsets = [0, 128], sizes = [8, 128], strides = [1, 1]} : vector<8x384xf32> to vector<8x128xf32>
    %111 = arith.addf %109, %110 : vector<8x128xf32>
    %112 = arith.negf %111 : vector<8x128xf32>
    %113 = math.exp %112 : vector<8x128xf32>
    %cst_44 = arith.constant 1.000000e+00 : f32
    %114 = vector.broadcast %cst_44 : f32 to vector<8x128xf32>
    %115 = arith.addf %114, %113 : vector<8x128xf32>
    %116 = arith.divf %114, %115 : vector<8x128xf32>
    %117 = vector.extract_strided_slice %100 {offsets = [0, 256], sizes = [8, 128], strides = [1, 1]} : vector<8x384xf32> to vector<8x128xf32>
    %118 = vector.extract_strided_slice %97 {offsets = [0, 256], sizes = [8, 128], strides = [1, 1]} : vector<8x384xf32> to vector<8x128xf32>
    %119 = arith.addf %118, %25 : vector<8x128xf32>
    %120 = arith.mulf %108, %119 : vector<8x128xf32>
    %121 = arith.addf %117, %120 : vector<8x128xf32>
    %122 = math.tanh %121 : vector<8x128xf32>
    %cst_45 = arith.constant 1.000000e+00 : f32
    %123 = vector.broadcast %cst_45 : f32 to vector<8x128xf32>
    %124 = arith.subf %123, %116 : vector<8x128xf32>
    %125 = arith.mulf %124, %122 : vector<8x128xf32>
    %126 = arith.mulf %116, %92 : vector<8x128xf32>
    %127 = arith.addf %125, %126 : vector<8x128xf32>
    %128 = arith.index_cast %c2_i32 : i32 to index
    %c0_46 = arith.constant 0 : index
    %c0_47 = arith.constant 0 : index
    %129 = vector.load %arg17[%128, %c0_46, %c0_47] : memref<4x8x128xf32, #tpu.memory_space<vmem>>, vector<1x8x128xf32>
    %130 = vector.shape_cast %129 : vector<1x8x128xf32> to vector<8x128xf32>
    %131 = vector.shape_cast %127 : vector<8x128xf32> to vector<1x8x128xf32>
    tpu.vector_store %arg17[%128, %c0_46, %c0_47], %131 {strides = array<i32>} : memref<4x8x128xf32, #tpu.memory_space<vmem>>, vector<1x8x128xf32>,
    %c3_i32 = arith.constant 3 : i32
    %cst_48 = arith.constant dense<0.000000e+00> : vector<8x384xf32>
    %132 = tpu.matmul %127, %22, %cst_48 {dimension_numbers = #tpu.dot_dimension_numbers<[1], [0], [0], [1], [0, 0, 1, 1], [], []>} : vector<8x128xf32>, vector<128x384xf32>, vector<8x384xf32> -> vector<8x384xf32>
    %133 = arith.index_cast %c3_i32 : i32 to index
    %c0_49 = arith.constant 0 : index
    %c0_50 = arith.constant 0 : index
    %134 = vector.load %arg16[%133, %c0_49, %c0_50] : memref<4x8x384xf32, #tpu.memory_space<vmem>>, vector<1x8x384xf32>
    %135 = vector.shape_cast %134 : vector<1x8x384xf32> to vector<8x384xf32>
    %136 = vector.extract_strided_slice %135 {offsets = [0, 0], sizes = [8, 128], strides = [1, 1]} : vector<8x384xf32> to vector<8x128xf32>
    %137 = vector.extract_strided_slice %132 {offsets = [0, 0], sizes = [8, 128], strides = [1, 1]} : vector<8x384xf32> to vector<8x128xf32>
    %138 = arith.addf %136, %137 : vector<8x128xf32>
    %139 = arith.negf %138 : vector<8x128xf32>
    %140 = math.exp %139 : vector<8x128xf32>
    %cst_51 = arith.constant 1.000000e+00 : f32
    %141 = vector.broadcast %cst_51 : f32 to vector<8x128xf32>
    %142 = arith.addf %141, %140 : vector<8x128xf32>
    %143 = arith.divf %141, %142 : vector<8x128xf32>
    %144 = vector.extract_strided_slice %135 {offsets = [0, 128], sizes = [8, 128], strides = [1, 1]} : vector<8x384xf32> to vector<8x128xf32>
    %145 = vector.extract_strided_slice %132 {offsets = [0, 128], sizes = [8, 128], strides = [1, 1]} : vector<8x384xf32> to vector<8x128xf32>
    %146 = arith.addf %144, %145 : vector<8x128xf32>
    %147 = arith.negf %146 : vector<8x128xf32>
    %148 = math.exp %147 : vector<8x128xf32>
    %cst_52 = arith.constant 1.000000e+00 : f32
    %149 = vector.broadcast %cst_52 : f32 to vector<8x128xf32>
    %150 = arith.addf %149, %148 : vector<8x128xf32>
    %151 = arith.divf %149, %150 : vector<8x128xf32>
    %152 = vector.extract_strided_slice %135 {offsets = [0, 256], sizes = [8, 128], strides = [1, 1]} : vector<8x384xf32> to vector<8x128xf32>
    %153 = vector.extract_strided_slice %132 {offsets = [0, 256], sizes = [8, 128], strides = [1, 1]} : vector<8x384xf32> to vector<8x128xf32>
    %154 = arith.addf %153, %25 : vector<8x128xf32>
    %155 = arith.mulf %143, %154 : vector<8x128xf32>
    %156 = arith.addf %152, %155 : vector<8x128xf32>
    %157 = math.tanh %156 : vector<8x128xf32>
    %cst_53 = arith.constant 1.000000e+00 : f32
    %158 = vector.broadcast %cst_53 : f32 to vector<8x128xf32>
    %159 = arith.subf %158, %151 : vector<8x128xf32>
    %160 = arith.mulf %159, %157 : vector<8x128xf32>
    %161 = arith.mulf %151, %127 : vector<8x128xf32>
    %162 = arith.addf %160, %161 : vector<8x128xf32>
    %163 = arith.index_cast %c3_i32 : i32 to index
    %c0_54 = arith.constant 0 : index
    %c0_55 = arith.constant 0 : index
    %164 = vector.load %arg17[%163, %c0_54, %c0_55] : memref<4x8x128xf32, #tpu.memory_space<vmem>>, vector<1x8x128xf32>
    %165 = vector.shape_cast %164 : vector<1x8x128xf32> to vector<8x128xf32>
    %166 = vector.shape_cast %162 : vector<8x128xf32> to vector<1x8x128xf32>
    tpu.vector_store %arg17[%163, %c0_54, %c0_55], %166 {strides = array<i32>} : memref<4x8x128xf32, #tpu.memory_space<vmem>>, vector<1x8x128xf32>,
    %c4_i32 = arith.constant 4 : i32
    %c0_56 = arith.constant 0 : index
    %c0_57 = arith.constant 0 : index
    %167 = vector.load %arg15[%c0_56, %c0_57] : memref<8x128xf32, #tpu.memory_space<vmem>>, vector<8x128xf32>
    tpu.vector_store %arg15[%c0_56, %c0_57], %162 {strides = array<i32>} : memref<8x128xf32, #tpu.memory_space<vmem>>, vector<8x128xf32>,
    %c1_i32_58 = arith.constant 1 : i32
    %168 = arith.cmpi eq, %arg1, %c1_i32_58 : i32
    %169 = arith.extui %168 : i1 to i32
    %c0_i32_59 = arith.constant 0 : i32
    %170 = arith.cmpi ne, %169, %c0_i32_59 : i32
    scf.if %170 {
      %c0_77 = arith.constant 0 : index
      %c0_78 = arith.constant 0 : index
      %191 = vector.load %arg14[%c0_77, %c0_78] : memref<8x128xf32, #tpu.memory_space<vmem>>, vector<8x128xf32>
      tpu.vector_store %arg14[%c0_77, %c0_78], %162 {strides = array<i32>} : memref<8x128xf32, #tpu.memory_space<vmem>>, vector<8x128xf32>,
    } else {
    }
    %c0_60 = arith.constant 0 : index
    %c0_61 = arith.constant 0 : index
    %c0_62 = arith.constant 0 : index
    %171 = vector.load %arg17[%c0_60, %c0_61, %c0_62] : memref<4x8x128xf32, #tpu.memory_space<vmem>>, vector<4x8x128xf32>
    %172 = vector.shape_cast %171 : vector<4x8x128xf32> to vector<32x128xf32>
    %c0_63 = arith.constant 0 : index
    %c0_64 = arith.constant 0 : index
    %173 = vector.load %arg10[%c0_63, %c0_64] : memref<128x128xf32, #tpu.memory_space<vmem>>, vector<128x128xf32>
    %cst_65 = arith.constant dense<0.000000e+00> : vector<32x128xf32>
    %174 = tpu.matmul %172, %173, %cst_65 {dimension_numbers = #tpu.dot_dimension_numbers<[1], [0], [0], [1], [0, 0, 1, 1], [], []>} : vector<32x128xf32>, vector<128x128xf32>, vector<32x128xf32> -> vector<32x128xf32>
    %c0_66 = arith.constant 0 : index
    %c0_67 = arith.constant 0 : index
    %175 = vector.load %arg11[%c0_66, %c0_67] : memref<1x128xf32, #tpu.memory_space<vmem>>, vector<1x128xf32>
    %176 = vector.broadcast %175 : vector<1x128xf32> to vector<32x128xf32>
    %177 = arith.addf %174, %176 : vector<32x128xf32>
    %cst_68 = arith.constant 0.000000e+00 : f32
    %178 = vector.broadcast %cst_68 : f32 to vector<32x128xf32>
    %179 = arith.cmpf ogt, %177, %178 : vector<32x128xf32>
    %cst_69 = arith.constant 0.00999999977 : f32
    %180 = vector.broadcast %cst_69 : f32 to vector<32x128xf32>
    %181 = arith.mulf %180, %177 : vector<32x128xf32>
    %182 = arith.select %179, %177, %181 : vector<32x128xi1>, vector<32x128xf32>
    %c0_70 = arith.constant 0 : index
    %c0_71 = arith.constant 0 : index
    %183 = vector.load %arg12[%c0_70, %c0_71] : memref<1x128xf32, #tpu.memory_space<vmem>>, vector<1x128xf32>
    %184 = vector.shape_cast %182 : vector<32x128xf32> to vector<4x8x128xf32>
    %185 = vector.shape_cast %183 : vector<1x128xf32> to vector<1x1x128xf32>
    %186 = vector.broadcast %185 : vector<1x1x128xf32> to vector<4x8x128xf32>
    %187 = arith.mulf %184, %186 : vector<4x8x128xf32>
    %cst_72 = arith.constant dense<0.000000e+00> : vector<4x8xf32>
    %188 = vector.multi_reduction <add>, %187, %cst_72 [2] : vector<4x8x128xf32> to vector<4x8xf32>
    %189 = vector.shape_cast %188 : vector<4x8xf32> to vector<1x1x4x8xf32>
    %c0_73 = arith.constant 0 : index
    %c0_74 = arith.constant 0 : index
    %c0_75 = arith.constant 0 : index
    %c0_76 = arith.constant 0 : index
    %190 = vector.load %arg13[%c0_73, %c0_74, %c0_75, %c0_76] : memref<1x1x4x8xf32, #tpu.memory_space<vmem>>, vector<1x1x4x8xf32>
    tpu.vector_store %arg13[%c0_73, %c0_74, %c0_75, %c0_76], %189 {strides = array<i32>} : memref<1x1x4x8xf32, #tpu.memory_space<vmem>>, vector<1x1x4x8xf32>,
    return
  }
  func.func @transform_0(%arg0: i32, %arg1: i32) -> (i32, i32, i32) {
    %c0_i32 = arith.constant 0 : i32
    %c0_i32_0 = arith.constant 0 : i32
    return %arg1, %arg0, %c0_i32 : i32, i32, i32
  }
  func.func @transform_1(%arg0: i32, %arg1: i32) -> (i32, i32) {
    %c0_i32 = arith.constant 0 : i32
    %c0_i32_0 = arith.constant 0 : i32
    return %arg0, %c0_i32 : i32, i32
  }
  func.func @transform_2(%arg0: i32, %arg1: i32) -> (i32, i32) {
    %c0_i32 = arith.constant 0 : i32
    %c0_i32_0 = arith.constant 0 : i32
    %c0_i32_1 = arith.constant 0 : i32
    return %c0_i32, %c0_i32_0 : i32, i32
  }
  func.func @transform_3(%arg0: i32, %arg1: i32) -> (i32, i32) {
    %c0_i32 = arith.constant 0 : i32
    %c0_i32_0 = arith.constant 0 : i32
    %c0_i32_1 = arith.constant 0 : i32
    return %c0_i32, %c0_i32_0 : i32, i32
  }
  func.func @transform_4(%arg0: i32, %arg1: i32) -> (i32, i32) {
    %c0_i32 = arith.constant 0 : i32
    %c0_i32_0 = arith.constant 0 : i32
    %c0_i32_1 = arith.constant 0 : i32
    return %c0_i32, %c0_i32_0 : i32, i32
  }
  func.func @transform_5(%arg0: i32, %arg1: i32) -> (i32, i32) {
    %c0_i32 = arith.constant 0 : i32
    %c0_i32_0 = arith.constant 0 : i32
    %c0_i32_1 = arith.constant 0 : i32
    return %c0_i32, %c0_i32_0 : i32, i32
  }
  func.func @transform_6(%arg0: i32, %arg1: i32) -> (i32, i32) {
    %c0_i32 = arith.constant 0 : i32
    %c0_i32_0 = arith.constant 0 : i32
    %c0_i32_1 = arith.constant 0 : i32
    return %c0_i32, %c0_i32_0 : i32, i32
  }
  func.func @transform_7(%arg0: i32, %arg1: i32) -> (i32, i32) {
    %c0_i32 = arith.constant 0 : i32
    %c0_i32_0 = arith.constant 0 : i32
    %c0_i32_1 = arith.constant 0 : i32
    return %c0_i32, %c0_i32_0 : i32, i32
  }
  func.func @transform_8(%arg0: i32, %arg1: i32) -> (i32, i32) {
    %c0_i32 = arith.constant 0 : i32
    %c0_i32_0 = arith.constant 0 : i32
    %c0_i32_1 = arith.constant 0 : i32
    return %c0_i32, %c0_i32_0 : i32, i32
  }
  func.func @transform_9(%arg0: i32, %arg1: i32) -> (i32, i32) {
    %c0_i32 = arith.constant 0 : i32
    %c0_i32_0 = arith.constant 0 : i32
    %c0_i32_1 = arith.constant 0 : i32
    return %c0_i32, %c0_i32_0 : i32, i32
  }
  func.func @transform_10(%arg0: i32, %arg1: i32) -> (i32, i32) {
    %c0_i32 = arith.constant 0 : i32
    %c0_i32_0 = arith.constant 0 : i32
    %c0_i32_1 = arith.constant 0 : i32
    return %c0_i32, %c0_i32_0 : i32, i32
  }
  func.func @transform_11(%arg0: i32, %arg1: i32) -> (i32, i32, i32, i32) {
    %c0_i32 = arith.constant 0 : i32
    %c0_i32_0 = arith.constant 0 : i32
    %c0_i32_1 = arith.constant 0 : i32
    return %arg0, %arg1, %c0_i32, %c0_i32_0 : i32, i32, i32, i32
  }
  func.func @transform_12(%arg0: i32, %arg1: i32) -> (i32, i32) {
    %c0_i32 = arith.constant 0 : i32
    %c0_i32_0 = arith.constant 0 : i32
    return %arg0, %c0_i32 : i32, i32
  }
}

</mosaic_0001>

<llo_original>
// kernel: rec_critic_forward.1
$region0: #{rec_critic_forward.1}
  #allocation0 [shape = 'u32[]', space=smem, size = 0x4, offset = 0x4, fixed_abs, tag = 'smem constant byte address 0x4 - core index']
  #allocation1 [shape = 'u32[144,128]{1,0:T(1,128)}', space=vmem, size = 0x12000, scoped, tag = 'internal scratch']
  #allocation2 [shape = 'f32[8,128]{1,0:T(8,128)}', space=vmem, size = 0x1000, scoped, tag = 'scratch operand']
  #allocation3 [shape = 'f32[4,8,384]{2,1,0:T(8,128)}', space=vmem, size = 0xc000, scoped, tag = 'scratch operand']
  #allocation4 [shape = 'f32[4,8,128]{2,1,0:T(8,128)}', space=vmem, size = 0x4000, scoped, tag = 'scratch operand']
  %s0 = inlined_call_operand.vmem [shape: f32[8,8,16], index: 0, kind: input, shape index: {}]
  %s1 = inlined_call_operand.vmem [shape: f32[8,128], index: 1, kind: input, shape index: {}]
  %s2 = inlined_call_operand.vmem [shape: f32[16,128], index: 2, kind: input, shape index: {}]
  %s3 = inlined_call_operand.vmem [shape: f32[1,128], index: 3, kind: input, shape index: {}]
  %s4 = inlined_call_operand.vmem [shape: f32[128,384], index: 4, kind: input, shape index: {}]
  %s5 = inlined_call_operand.vmem [shape: f32[1,384], index: 5, kind: input, shape index: {}]
  %s6 = inlined_call_operand.vmem [shape: f32[128,384], index: 6, kind: input, shape index: {}]
  %s7 = inlined_call_operand.vmem [shape: f32[1,128], index: 7, kind: input, shape index: {}]
  %s8 = inlined_call_operand.vmem [shape: f32[128,128], index: 8, kind: input, shape index: {}]
  %s9 = inlined_call_operand.vmem [shape: f32[1,128], index: 9, kind: input, shape index: {}]
  %s10 = inlined_call_operand.vmem [shape: f32[1,128], index: 10, kind: input, shape index: {}]
  %s11 = inlined_call_operand.vmem [shape: f32[1,2,4,8], index: 11, kind: output, shape index: {0}]
  %s12 = inlined_call_operand.vmem [shape: f32[8,128], index: 12, kind: output, shape index: {1}]
  %13 = xla_tuple %s11, %s12
  %s14 = sld [smem:[#allocation0]]
  $region93: #{rec_critic_forward.1} parent=0
    _
  %s16 = ssub.s32 1, %s14
  %s17 = scalar_select 0, %s16, %s14
  loop: start=0, step=1, limit=4
  $region2: #{rec_critic_forward.1} parent=0 // loop_pre_header
    _
  $region3: #{rec_critic_forward.1} parent=0 // loop_header
    %s19 = sphi 0, %s23
    %p20 = scmp.ge.s32.totalorder %s19, 4
    %s26 = sphi 0, %s38
    %s27 = sphi 0, %s34
    %s28 = sphi 0, %s26
    %s29 = sphi 0, %s27
    %s30 = sphi 0, %s28
    %s31 = sphi 0, %s29
    %s43 = sphi 0, %s45
    %s46 = sphi 0, %s43
    %s47 = sphi 0, %s46
    %s63 = sphi 0, %s47
    %s69 = sphi 0, %s71
    %s72 = sphi 0, %s69
    %s73 = sphi 0, %s72
    %s89 = sphi 0, %s73
    %s93 = sphi 0, %s93
    %s95 = sphi 0, %s93
    %s96 = sphi 0, %s95
    %s110 = sphi 0, %s96
    %s114 = sphi 0, %s114
    %s116 = sphi 0, %s114
    %s117 = sphi 0, %s116
    %s131 = sphi 0, %s117
    %s135 = sphi 0, %s135
    %s137 = sphi 0, %s135
    %s138 = sphi 0, %s137
    %s152 = sphi 0, %s138
    %s156 = sphi 0, %s156
    %s158 = sphi 0, %s156
    %s159 = sphi 0, %s158
    %s173 = sphi 0, %s159
    %s177 = sphi 0, %s177
    %s179 = sphi 0, %s177
    %s180 = sphi 0, %s179
    %s194 = sphi 0, %s180
    %s198 = sphi 0, %s198
    %s200 = sphi 0, %s198
    %s201 = sphi 0, %s200
    %s215 = sphi 0, %s201
    %s219 = sphi 0, %s219
    %s221 = sphi 0, %s219
    %s222 = sphi 0, %s221
    %s236 = sphi 0, %s222
    %s240 = sphi 0, %s240
    %s242 = sphi 0, %s240
    %s243 = sphi 0, %s242
    %s257 = sphi 0, %s243
    %s261 = sphi 0, %s261
    %s263 = sphi 0, %s261
    %s264 = sphi 0, %s263
    %s278 = sphi 0, %s264
    %s286 = sphi 0, %s288
    %s289 = sphi 0, %s286
    %s290 = sphi 0, %s289
    %s306 = sphi 0, %s290
    %s312 = sphi 0, %s314
    %s315 = sphi 0, %s312
    %s316 = sphi 0, %s315
    %s332 = sphi 0, %s316
  $region4: #{rec_critic_forward.1} parent=0 // loop_header_branch
    %22 = sbr.rel (%p20) target = $region8
  $region5: #{rec_critic_forward.1} parent=0 // loop_body
    %s24 = ssub.s32 %s19, 1
    %s25 = ssub.s32 %s19, 2
    %s32 = sadd.s32 1, %s27
    %p33 = scmp.ge.s32.totalorder %s32, 2
    %s34 = scalar_select %p33, 0, %s32
    %s35 = sadd.s32 1, %s26
    %s36 = scalar_select %p33, %s35, %s26
    %p37 = scmp.ge.s32.totalorder %s36, 1
    %s38 = scalar_select %p37, 0, %s36
    %s39 = ssub.s32 %s27, %s34
    %s40 = ssub.s32 %s26, %s38
    %s41 = sor.u32 %s39, %s40
    %p42 = scmp.eq.s32.totalorder %s41, 0
    %s44 = sadd.s32 %s43, 1
    %s45 = scalar_select %p42, %s43, %s44
    %p48 = pneg %p42
    %p49 = scmp.eq.s32.totalorder %s19, 1
    %p50 = por %p48, %p49
    %p51 = scmp.ne.s32.totalorder %s43, %s46
    %p52 = scmp.eq.s32.totalorder %s19, 0
    %p53 = por %p51, %p52
    %p54 = scmp.ne.s32.totalorder %s43, %s46
    %p55 = scmp.eq.s32.totalorder %s24, 1
    %p56 = por %p54, %p55
    %p57 = scmp.ne.s32.totalorder %s46, %s47
    %p58 = scmp.eq.s32.totalorder %s24, 0
    %p59 = por %p57, %p58
    %p60 = scmp.ne.s32.totalorder %s46, %s47
    %p61 = scmp.eq.s32.totalorder %s25, 1
    %p62 = por %p60, %p61
    %p64 = scmp.ne.s32.totalorder %s47, %s63
    %p65 = scmp.eq.s32.totalorder %s25, 0
    %p66 = por %p64, %p65
    %s67 = ssub.s32 %s26, %s38
    %p68 = scmp.eq.s32.totalorder %s67, 0
    %s70 = sadd.s32 %s69, 1
    %s71 = scalar_select %p68, %s69, %s70
    %p74 = pneg %p68
    %p75 = scmp.eq.s32.totalorder %s19, 1
    %p76 = por %p74, %p75
    %p77 = scmp.ne.s32.totalorder %s69, %s72
    %p78 = scmp.eq.s32.totalorder %s19, 0
    %p79 = por %p77, %p78
    %p80 = scmp.ne.s32.totalorder %s69, %s72
    %p81 = scmp.eq.s32.totalorder %s24, 1
    %p82 = por %p80, %p81
    %p83 = scmp.ne.s32.totalorder %s72, %s73
    %p84 = scmp.eq.s32.totalorder %s24, 0
    %p85 = por %p83, %p84
    %p86 = scmp.ne.s32.totalorder %s72, %s73
    %p87 = scmp.eq.s32.totalorder %s25, 1
    %p88 = por %p86, %p87
    %p90 = scmp.ne.s32.totalorder %s73, %s89
    %p91 = scmp.eq.s32.totalorder %s25, 0
    %p92 = por %p90, %p91
    %s94 = sadd.s32 %s93, 1
    %p97 = scmp.eq.s32.totalorder %s19, 1
    %p98 = scmp.ne.s32.totalorder %s93, %s95
    %p99 = scmp.eq.s32.totalorder %s19, 0
    %p100 = por %p98, %p99
    %p101 = scmp.ne.s32.totalorder %s93, %s95
    %p102 = scmp.eq.s32.totalorder %s24, 1
    %p103 = por %p101, %p102
    %p104 = scmp.ne.s32.totalorder %s95, %s96
    %p105 = scmp.eq.s32.totalorder %s24, 0
    %p106 = por %p104, %p105
    %p107 = scmp.ne.s32.totalorder %s95, %s96
    %p108 = scmp.eq.s32.totalorder %s25, 1
    %p109 = por %p107, %p108
    %p111 = scmp.ne.s32.totalorder %s96, %s110
    %p112 = scmp.eq.s32.totalorder %s25, 0
    %p113 = por %p111, %p112
    %s115 = sadd.s32 %s114, 1
    %p118 = scmp.eq.s32.totalorder %s19, 1
    %p119 = scmp.ne.s32.totalorder %s114, %s116
    %p120 = scmp.eq.s32.totalorder %s19, 0
    %p121 = por %p119, %p120
    %p122 = scmp.ne.s32.totalorder %s114, %s116
    %p123 = scmp.eq.s32.totalorder %s24, 1
    %p124 = por %p122, %p123
    %p125 = scmp.ne.s32.totalorder %s116, %s117
    %p126 = scmp.eq.s32.totalorder %s24, 0
    %p127 = por %p125, %p126
    %p128 = scmp.ne.s32.totalorder %s116, %s117
    %p129 = scmp.eq.s32.totalorder %s25, 1
    %p130 = por %p128, %p129
    %p132 = scmp.ne.s32.totalorder %s117, %s131
    %p133 = scmp.eq.s32.totalorder %s25, 0
    %p134 = por %p132, %p133
    %s136 = sadd.s32 %s135, 1
    %p139 = scmp.eq.s32.totalorder %s19, 1
    %p140 = scmp.ne.s32.totalorder %s135, %s137
    %p141 = scmp.eq.s32.totalorder %s19, 0
    %p142 = por %p140, %p141
    %p143 = scmp.ne.s32.totalorder %s135, %s137
    %p144 = scmp.eq.s32.totalorder %s24, 1
    %p145 = por %p143, %p144
    %p146 = scmp.ne.s32.totalorder %s137, %s138
    %p147 = scmp.eq.s32.totalorder %s24, 0
    %p148 = por %p146, %p147
    %p149 = scmp.ne.s32.totalorder %s137, %s138
    %p150 = scmp.eq.s32.totalorder %s25, 1
    %p151 = por %p149, %p150
    %p153 = scmp.ne.s32.totalorder %s138, %s152
    %p154 = scmp.eq.s32.totalorder %s25, 0
    %p155 = por %p153, %p154
    %s157 = sadd.s32 %s156, 1
    %p160 = scmp.eq.s32.totalorder %s19, 1
    %p161 = scmp.ne.s32.totalorder %s156, %s158
    %p162 = scmp.eq.s32.totalorder %s19, 0
    %p163 = por %p161, %p162
    %p164 = scmp.ne.s32.totalorder %s156, %s158
    %p165 = scmp.eq.s32.totalorder %s24, 1
    %p166 = por %p164, %p165
    %p167 = scmp.ne.s32.totalorder %s158, %s159
    %p168 = scmp.eq.s32.totalorder %s24, 0
    %p169 = por %p167, %p168
    %p170 = scmp.ne.s32.totalorder %s158, %s159
    %p171 = scmp.eq.s32.totalorder %s25, 1
    %p172 = por %p170, %p171
    %p174 = scmp.ne.s32.totalorder %s159, %s173
    %p175 = scmp.eq.s32.totalorder %s25, 0
    %p176 = por %p174, %p175
    %s178 = sadd.s32 %s177, 1
    %p181 = scmp.eq.s32.totalorder %s19, 1
    %p182 = scmp.ne.s32.totalorder %s177, %s179
    %p183 = scmp.eq.s32.totalorder %s19, 0
    %p184 = por %p182, %p183
    %p185 = scmp.ne.s32.totalorder %s177, %s179
    %p186 = scmp.eq.s32.totalorder %s24, 1
    %p187 = por %p185, %p186
    %p188 = scmp.ne.s32.totalorder %s179, %s180
    %p189 = scmp.eq.s32.totalorder %s24, 0
    %p190 = por %p188, %p189
    %p191 = scmp.ne.s32.totalorder %s179, %s180
    %p192 = scmp.eq.s32.totalorder %s25, 1
    %p193 = por %p191, %p192
    %p195 = scmp.ne.s32.totalorder %s180, %s194
    %p196 = scmp.eq.s32.totalorder %s25, 0
    %p197 = por %p195, %p196
    %s199 = sadd.s32 %s198, 1
    %p202 = scmp.eq.s32.totalorder %s19, 1
    %p203 = scmp.ne.s32.totalorder %s198, %s200
    %p204 = scmp.eq.s32.totalorder %s19, 0
    %p205 = por %p203, %p204
    %p206 = scmp.ne.s32.totalorder %s198, %s200
    %p207 = scmp.eq.s32.totalorder %s24, 1
    %p208 = por %p206, %p207
    %p209 = scmp.ne.s32.totalorder %s200, %s201
    %p210 = scmp.eq.s32.totalorder %s24, 0
    %p211 = por %p209, %p210
    %p212 = scmp.ne.s32.totalorder %s200, %s201
    %p213 = scmp.eq.s32.totalorder %s25, 1
    %p214 = por %p212, %p213
    %p216 = scmp.ne.s32.totalorder %s201, %s215
    %p217 = scmp.eq.s32.totalorder %s25, 0
    %p218 = por %p216, %p217
    %s220 = sadd.s32 %s219, 1
    %p223 = scmp.eq.s32.totalorder %s19, 1
    %p224 = scmp.ne.s32.totalorder %s219, %s221
    %p225 = scmp.eq.s32.totalorder %s19, 0
    %p226 = por %p224, %p225
    %p227 = scmp.ne.s32.totalorder %s219, %s221
    %p228 = scmp.eq.s32.totalorder %s24, 1
    %p229 = por %p227, %p228
    %p230 = scmp.ne.s32.totalorder %s221, %s222
    %p231 = scmp.eq.s32.totalorder %s24, 0
    %p232 = por %p230, %p231
    %p233 = scmp.ne.s32.totalorder %s221, %s222
    %p234 = scmp.eq.s32.totalorder %s25, 1
    %p235 = por %p233, %p234
    %p237 = scmp.ne.s32.totalorder %s222, %s236
    %p238 = scmp.eq.s32.totalorder %s25, 0
    %p239 = por %p237, %p238
    %s241 = sadd.s32 %s240, 1
    %p244 = scmp.eq.s32.totalorder %s19, 1
    %p245 = scmp.ne.s32.totalorder %s240, %s242
    %p246 = scmp.eq.s32.totalorder %s19, 0
    %p247 = por %p245, %p246
    %p248 = scmp.ne.s32.totalorder %s240, %s242
    %p249 = scmp.eq.s32.totalorder %s24, 1
    %p250 = por %p248, %p249
    %p251 = scmp.ne.s32.totalorder %s242, %s243
    %p252 = scmp.eq.s32.totalorder %s24, 0
    %p253 = por %p251, %p252
    %p254 = scmp.ne.s32.totalorder %s242, %s243
    %p255 = scmp.eq.s32.totalorder %s25, 1
    %p256 = por %p254, %p255
    %p258 = scmp.ne.s32.totalorder %s243, %s257
    %p259 = scmp.eq.s32.totalorder %s25, 0
    %p260 = por %p258, %p259
    %s262 = sadd.s32 %s261, 1
    %p265 = scmp.eq.s32.totalorder %s19, 1
    %p266 = scmp.ne.s32.totalorder %s261, %s263
    %p267 = scmp.eq.s32.totalorder %s19, 0
    %p268 = por %p266, %p267
    %p269 = scmp.ne.s32.totalorder %s261, %s263
    %p270 = scmp.eq.s32.totalorder %s24, 1
    %p271 = por %p269, %p270
    %p272 = scmp.ne.s32.totalorder %s263, %s264
    %p273 = scmp.eq.s32.totalorder %s24, 0
    %p274 = por %p272, %p273
    %p275 = scmp.ne.s32.totalorder %s263, %s264
    %p276 = scmp.eq.s32.totalorder %s25, 1
    %p277 = por %p275, %p276
    %p279 = scmp.ne.s32.totalorder %s264, %s278
    %p280 = scmp.eq.s32.totalorder %s25, 0
    %p281 = por %p279, %p280
    %s282 = ssub.s32 %s26, %s38
    %s283 = ssub.s32 %s27, %s34
    %s284 = sor.u32 %s282, %s283
    %p285 = scmp.eq.s32.totalorder %s284, 0
    %s287 = sadd.s32 %s286, 1
    %s288 = scalar_select %p285, %s286, %s287
    %p291 = pneg %p285
    %p292 = scmp.eq.s32.totalorder %s19, 1
    %p293 = por %p291, %p292
    %p294 = scmp.ne.s32.totalorder %s286, %s289
    %p295 = scmp.eq.s32.totalorder %s19, 0
    %p296 = por %p294, %p295
    %p297 = scmp.ne.s32.totalorder %s286, %s289
    %p298 = scmp.eq.s32.totalorder %s24, 1
    %p299 = por %p297, %p298
    %p300 = scmp.ne.s32.totalorder %s289, %s290
    %p301 = scmp.eq.s32.totalorder %s24, 0
    %p302 = por %p300, %p301
    %p303 = scmp.ne.s32.totalorder %s289, %s290
    %p304 = scmp.eq.s32.totalorder %s25, 1
    %p305 = por %p303, %p304
    %p307 = scmp.ne.s32.totalorder %s290, %s306
    %p308 = scmp.eq.s32.totalorder %s25, 0
    %p309 = por %p307, %p308
    %s310 = ssub.s32 %s26, %s38
    %p311 = scmp.eq.s32.totalorder %s310, 0
    %s313 = sadd.s32 %s312, 1
    %s314 = scalar_select %p311, %s312, %s313
    %p317 = pneg %p311
    %p318 = scmp.eq.s32.totalorder %s19, 1
    %p319 = por %p317, %p318
    %p320 = scmp.ne.s32.totalorder %s312, %s315
    %p321 = scmp.eq.s32.totalorder %s19, 0
    %p322 = por %p320, %p321
    %p323 = scmp.ne.s32.totalorder %s312, %s315
    %p324 = scmp.eq.s32.totalorder %s24, 1
    %p325 = por %p323, %p324
    %p326 = scmp.ne.s32.totalorder %s315, %s316
    %p327 = scmp.eq.s32.totalorder %s24, 0
    %p328 = por %p326, %p327
    %p329 = scmp.ne.s32.totalorder %s315, %s316
    %p330 = scmp.eq.s32.totalorder %s25, 1
    %p331 = por %p329, %p330
    %p333 = scmp.ne.s32.totalorder %s316, %s332
    %p334 = scmp.eq.s32.totalorder %s25, 0
    %p335 = por %p333, %p334
    %p336 = scmp.le.s32.totalorder 1, %s19
    %p337 = scmp.lt.s32.totalorder %s19, 3
    %p338 = pnand %p336, %p337
    %p339 = pneg %p338
    // Predicated region
    $region9: #{rec_critic_forward.1} parent=5 // pred_check
      _
    $region10: #{rec_critic_forward.1} parent=5 // pred_check_branch
      %341 = sbr.rel (%p338) target = $region12
    $region11: #{rec_critic_forward.1} parent=5 // pred_region
      %s342 = ssub.s32 %s19, 1
      // Predicated region
      $region13: #{rec_critic_forward.1} parent=11 // pred_check
        %p343 = pneg %p85
      $region14: #{rec_critic_forward.1} parent=11 // pred_check_branch
        %345 = sbr.rel (%p343) target = $region16
      $region15: #{rec_critic_forward.1} parent=11 // pred_region
        %p346 = scmp.lt.s32.totalorder %s28, 0
        %s347 = scalar_select %p346, %s28, 0
        %s348 = smul.addr %s347, 8
        %s349 = scalar_lea.vmem %s1, %s348
      $region16: #{rec_critic_forward.1} parent=11 // pred_fallthru
        _
      // Predicated region
      $region17: #{rec_critic_forward.1} parent=11 // pred_check
        %p350 = pneg %p106
      $region18: #{rec_critic_forward.1} parent=11 // pred_check_branch
        %352 = sbr.rel (%p350) target = $region20
      $region19: #{rec_critic_forward.1} parent=11 // pred_region
        _
      $region20: #{rec_critic_forward.1} parent=11 // pred_fallthru
        _
      // Predicated region
      $region21: #{rec_critic_forward.1} parent=11 // pred_check
        %p353 = pneg %p127
      $region22: #{rec_critic_forward.1} parent=11 // pred_check_branch
        %355 = sbr.rel (%p353) target = $region24
      $region23: #{rec_critic_forward.1} parent=11 // pred_region
        _
      $region24: #{rec_critic_forward.1} parent=11 // pred_fallthru
        _
      // Predicated region
      $region25: #{rec_critic_forward.1} parent=11 // pred_check
        %p356 = pneg %p148
      $region26: #{rec_critic_forward.1} parent=11 // pred_check_branch
        %358 = sbr.rel (%p356) target = $region28
      $region27: #{rec_critic_forward.1} parent=11 // pred_region
        _
      $region28: #{rec_critic_forward.1} parent=11 // pred_fallthru
        _
      // Predicated region
      $region29: #{rec_critic_forward.1} parent=11 // pred_check
        %p359 = pneg %p169
      $region30: #{rec_critic_forward.1} parent=11 // pred_check_branch
        %361 = sbr.rel (%p359) target = $region32
      $region31: #{rec_critic_forward.1} parent=11 // pred_region
        _
      $region32: #{rec_critic_forward.1} parent=11 // pred_fallthru
        _
      // Predicated region
      $region33: #{rec_critic_forward.1} parent=11 // pred_check
        %p362 = pneg %p190
      $region34: #{rec_critic_forward.1} parent=11 // pred_check_branch
        %364 = sbr.rel (%p362) target = $region36
      $region35: #{rec_critic_forward.1} parent=11 // pred_region
        _
      $region36: #{rec_critic_forward.1} parent=11 // pred_fallthru
        _
      // Predicated region
      $region37: #{rec_critic_forward.1} parent=11 // pred_check
        %p365 = pneg %p211
      $region38: #{rec_critic_forward.1} parent=11 // pred_check_branch
        %367 = sbr.rel (%p365) target = $region40
      $region39: #{rec_critic_forward.1} parent=11 // pred_region
        _
      $region40: #{rec_critic_forward.1} parent=11 // pred_fallthru
        _
      // Predicated region
      $region41: #{rec_critic_forward.1} parent=11 // pred_check
        %p368 = pneg %p232
      $region42: #{rec_critic_forward.1} parent=11 // pred_check_branch
        %370 = sbr.rel (%p368) target = $region44
      $region43: #{rec_critic_forward.1} parent=11 // pred_region
        _
      $region44: #{rec_critic_forward.1} parent=11 // pred_fallthru
        _
      // Predicated region
      $region45: #{rec_critic_forward.1} parent=11 // pred_check
        %p371 = pneg %p253
      $region46: #{rec_critic_forward.1} parent=11 // pred_check_branch
        %373 = sbr.rel (%p371) target = $region48
      $region47: #{rec_critic_forward.1} parent=11 // pred_region
        _
      $region48: #{rec_critic_forward.1} parent=11 // pred_fallthru
        _
      // Predicated region
      $region49: #{rec_critic_forward.1} parent=11 // pred_check
        %p374 = pneg %p274
      $region50: #{rec_critic_forward.1} parent=11 // pred_check_branch
        %376 = sbr.rel (%p374) target = $region52
      $region51: #{rec_critic_forward.1} parent=11 // pred_region
        _
      $region52: #{rec_critic_forward.1} parent=11 // pred_fallthru
        _
    $region12: #{rec_critic_forward.1} parent=5 // pred_fallthru
      _
    %p377 = scmp.lt.s32.totalorder %s19, 2
    // Predicated region
    $region53: #{rec_critic_forward.1} parent=5 // pred_check
      %p378 = pneg %p377
    $region54: #{rec_critic_forward.1} parent=5 // pred_check_branch
      %380 = sbr.rel (%p378) target = $region56
    $region55: #{rec_critic_forward.1} parent=5 // pred_region
      // Predicated region
      $region57: #{rec_critic_forward.1} parent=55 // pred_check
        %p381 = pneg %p53
      $region58: #{rec_critic_forward.1} parent=55 // pred_check_branch
        %383 = sbr.rel (%p381) target = $region60
      $region59: #{rec_critic_forward.1} parent=55 // pred_region
        %s384 = smul.u32 4, %s27
        %p385 = scmp.lt.s32.totalorder %s384, 7
        %s386 = scalar_select %p385, %s384, 7
        %p387 = scmp.lt.s32.totalorder %s26, 0
        %s388 = scalar_select %p387, %s26, 0
        %s389 = sadd.s32 %s388, %s386
        %s390 = smul.addr %s389, 8
        %s391 = scalar_lea.vmem %s0, %s390
        %s392 = smul.u32 4, %s27
      $region60: #{rec_critic_forward.1} parent=55 // pred_fallthru
        _
    $region56: #{rec_critic_forward.1} parent=5 // pred_fallthru
      _
    %p393 = scmp.le.s32.totalorder 1, %s19
    %p394 = scmp.lt.s32.totalorder %s19, 3
    %p395 = pnand %p393, %p394
    %p396 = pneg %p395
    // Predicated region
    $region61: #{rec_critic_forward.1} parent=5 // pred_check
      _
    $region62: #{rec_critic_forward.1} parent=5 // pred_check_branch
      %398 = sbr.rel (%p395) target = $region64
    $region63: #{rec_critic_forward.1} parent=5 // pred_region
      %s399 = ssub.s32 %s19, 1
      %s400 = smul.u32 4, %s29
      %p401 = scmp.lt.s32.totalorder %s400, 7
      %s402 = scalar_select %p401, %s400, 7
      %p403 = scmp.lt.s32.totalorder %s28, 0
      %s404 = scalar_select %p403, %s28, 0
      %s405 = sadd.s32 %s404, %s402
      %s406 = smul.addr %s405, 8
      %s407 = scalar_lea.vmem %s0, %s406
      %p408 = pneg %p59
      %p409 = pneg %p56
      %p410 = scmp.lt.s32.totalorder %s28, 0
      %s411 = scalar_select %p410, %s28, 0
      %s412 = smul.addr %s411, 8
      %s413 = scalar_lea.vmem %s1, %s412
      %p414 = pneg %p85
      %p415 = pneg %p82
      %p416 = pneg %p106
      %p417 = pneg %p103
      %p418 = pneg %p127
      %p419 = pneg %p124
      %p420 = pneg %p148
      %p421 = pneg %p145
      %p422 = pneg %p169
      %p423 = pneg %p166
      %p424 = pneg %p190
      %p425 = pneg %p187
      %p426 = pneg %p211
      %p427 = pneg %p208
      %p428 = pneg %p232
      %p429 = pneg %p229
      %p430 = pneg %p253
      %p431 = pneg %p250
      %p432 = pneg %p274
      %p433 = pneg %p271
      %p434 = pneg %p302
      %p435 = pneg %p299
      %p436 = scmp.lt.s32.totalorder %s28, 0
      %s437 = scalar_select %p436, %s28, 0
      %p438 = scmp.lt.s32.totalorder %s29, 1
      %s439 = scalar_select %p438, %s29, 1
      %s440 = smul.addr %s437, 2
      %s441 = sadd.s32 %s439, %s440
      %s442 = smul.addr %s441, 4
      %s443 = scalar_lea.vmem %s11, %s442
      %p444 = pneg %p328
      %p445 = pneg %p325
      %p446 = scmp.lt.s32.totalorder %s28, 0
      %s447 = scalar_select %p446, %s28, 0
      %s448 = smul.addr %s447, 8
      %s449 = scalar_lea.vmem %s12, %s448
      %s450 = smul.u32 4, %s29
      %p451 = scmp.lt.s32.totalorder %s450, 7
      %s452 = scalar_select %p451, %s450, 7
      %p453 = scmp.lt.s32.totalorder %s28, 0
      %s454 = scalar_select %p453, %s28, 0
      %s455 = sadd.s32 %s454, %s452
      %s456 = smul.addr %s455, 8
      %s457 = scalar_lea.vmem %s0, %s456
      %s458 = smul.u32 4, %s29
      %p459 = scmp.lt.s32.totalorder %s28, 0
      %s460 = scalar_select %p459, %s28, 0
      %s461 = smul.addr %s460, 8
      %s462 = scalar_lea.vmem %s1, %s461
      %p463 = scmp.lt.s32.totalorder %s28, 0
      %s464 = scalar_select %p463, %s28, 0
      %p465 = scmp.lt.s32.totalorder %s29, 1
      %s466 = scalar_select %p465, %s29, 1
      %s467 = smul.addr %s464, 2
      %s468 = sadd.s32 %s466, %s467
      %s469 = smul.addr %s468, 4
      %s470 = scalar_lea.vmem %s11, %s469
      %p471 = scmp.lt.s32.totalorder %s28, 0
      %s472 = scalar_select %p471, %s28, 0
      %s473 = smul.addr %s472, 8
      %s474 = scalar_lea.vmem %s12, %s473
      %p475 = scmp.eq.s32.totalorder %s29, 0
      // Predicated region
      $region65: #{rec_critic_forward.1} parent=63 // pred_check
        %p476 = pneg %p475
      $region66: #{rec_critic_forward.1} parent=63 // pred_check_branch
        %478 = sbr.rel (%p476) target = $region68
      $region67: #{rec_critic_forward.1} parent=63 // pred_region
        %v479 = vld [vmem:[%s462] sm:$0xff]
        %480 = vst [vmem:[#allocation2] sm:$0xff] %v479
      $region68: #{rec_critic_forward.1} parent=63 // pred_fallthru
        _
      %v481 = vld [vmem:[%s457] sm:$0xff]
      %v482 = vld [vmem:[%s457 + $0x8] sm:$0xff]
      %v483 = vld [vmem:[%s457 + $0x10] sm:$0xff]
      %v484 = vld [vmem:[%s457 + $0x18] sm:$0xff]
      %v485 = vld [vmem:[%s2] sm:$0xff]
      %v486 = vld [vmem:[%s2 + $0x8] sm:$0xff]
      %v487 = vld [vmem:[%s3] sm:$0x1]
      %v489 = vlaneseq
      %v490 = vshrl.u32 %v489, 7
      %v491 = vsub.s32 0, %v490
      %v492 = vrot.slane %v487, %v491
      %vm494 = vcmask 130048
      %v496 = vsel %vm494, %v481, 0
      %v499 = vsel %vm494, %v482, 0
      %v502 = vsel %vm494, %v483, 0
      %v505 = vsel %vm494, %v484, 0
      %507 = vmatprep.subr.mxu0 0.0
      %508 = vmatpush1.msra.mxu0 %v485
      %509 = vmatprep.subr.mxu0 0.0
      %510 = vmatpush1.msra.mxu0 %v486
      %511 = vmatprep.subr.mxu0 0.0
      %512 = vmatpush1.msra.mxu0 0.0
      %513 = vmatprep.subr.mxu0 0.0
      %514 = vmatpush1.msra.mxu0 0.0
      %515 = vmatprep.subr.mxu0 0.0
      %516 = vmatpush1.msra.mxu0 0.0
      %517 = vmatprep.subr.mxu0 0.0
      %518 = vmatpush1.msra.mxu0 0.0
      %519 = vmatprep.subr.mxu0 0.0
      %520 = vmatpush1.msra.mxu0 0.0
      %521 = vmatprep.subr.mxu0 0.0
      %522 = vmatpush1.msra.mxu0 0.0
      %523 = vmatprep.subr.mxu0 0.0
      %524 = vmatpush1.msra.mxu0 0.0
      %525 = vmatprep.subr.mxu0 0.0
      %526 = vmatpush1.msra.mxu0 0.0
      %527 = vmatprep.subr.mxu0 0.0
      %528 = vmatpush1.msra.mxu0 0.0
      %529 = vmatprep.subr.mxu0 0.0
      %530 = vmatpush1.msra.mxu0 0.0
      %531 = vmatprep.subr.mxu0 0.0
      %532 = vmatpush1.msra.mxu0 0.0
      %533 = vmatprep.subr.mxu0 0.0
      %534 = vmatpush1.msra.mxu0 0.0
      %535 = vmatprep.subr.mxu0 0.0
      %536 = vmatpush1.msra.mxu0 0.0
      %537 = vmatprep.subr.mxu0 0.0
      %538 = vmatpush1.msra.mxu0 0.0
      %539 = vmatprep.subr.mxu0 0.0
      %540 = vmatpush1.msra.mxu0 0.0
      %541 = vmatprep.subr.mxu0 0.0
      %542 = vmatpush1.msra.mxu0 0.0
      %543 = vmatprep.subr.mxu0 0.0
      %544 = vmatpush1.msra.mxu0 0.0
      %545 = vmatprep.subr.mxu0 0.0
      %546 = vmatpush1.msra.mxu0 0.0
      %547 = vmatprep.subr.mxu0 0.0
      %548 = vmatpush1.msra.mxu0 0.0
      %549 = vmatprep.subr.mxu0 0.0
      %550 = vmatpush1.msra.mxu0 0.0
      %551 = vmatprep.subr.mxu0 0.0
      %552 = vmatpush1.msra.mxu0 0.0
      %553 = vmatprep.subr.mxu0 0.0
      %554 = vmatpush1.msra.mxu0 0.0
      %555 = vmatprep.subr.mxu0 0.0
      %556 = vmatpush1.msra.mxu0 0.0
      %557 = vmatprep.subr.mxu0 0.0
      %558 = vmatpush1.msra.mxu0 0.0
      %559 = vmatprep.subr.mxu0 0.0
      %560 = vmatpush1.msra.mxu0 0.0
      %561 = vmatprep.subr.mxu0 0.0
      %562 = vmatpush1.msra.mxu0 0.0
      %563 = vmatprep.subr.mxu0 0.0
      %564 = vmatpush1.msra.mxu0 0.0
      %565 = vmatprep.subr.mxu0 0.0
      %566 = vmatpush1.msra.mxu0 0.0
      %567 = vmatprep.subr.mxu0 0.0
      %568 = vmatpush1.msra.mxu0 0.0
      %569 = vmatprep.subr.mxu0 0.0
      %570 = vmatpush1.msra.mxu0 0.0
      %571 = vmatprep.mubr.f32.mxu0 0.0
      %572 = vmatmul.mubr.f32.gmra.mrb[0].mxu0 %v496
      %v573 = vpop.f32.mrb[0].mxu0
      %v574 = vadd.f32 %v492, %v573
      %v575 = vpop.f32.mrb[0].mxu0
      %576 = vmatprep.mubr.f32.mxu0 0.0
      %577 = vmatmul.mubr.f32.gmra.mrb[0].mxu0 %v499
      %v578 = vpop.f32.mrb[0].mxu0
      %v579 = vadd.f32 %v492, %v578
      %v580 = vpop.f32.mrb[0].mxu0
      %581 = vmatprep.mubr.f32.mxu0 0.0
      %582 = vmatmul.mubr.f32.gmra.mrb[0].mxu0 %v502
      %v583 = vpop.f32.mrb[0].mxu0
      %v584 = vadd.f32 %v492, %v583
      %v585 = vpop.f32.mrb[0].mxu0
      %586 = vmatprep.mubr.f32.mxu0 0.0
      %587 = vmatmul.mubr.f32.gmra.mrb[0].mxu0 %v505
      %v588 = vpop.f32.mrb[0].mxu0
      %v589 = vadd.f32 %v492, %v588
      %v590 = vpop.f32.mrb[0].mxu0
      %591 = vdwg.mxu0
      %vm592 = vcmp.gt.f32.partialorder %v574, 0.0
      %vm593 = vcmp.gt.f32.partialorder %v579, 0.0
      %vm594 = vcmp.gt.f32.partialorder %v584, 0.0
      %vm595 = vcmp.gt.f32.partialorder %v589, 0.0
      %v596 = vmul.f32 %v574, 0.01
      %v597 = vmul.f32 %v579, 0.01
      %v598 = vmul.f32 %v584, 0.01
      %v599 = vmul.f32 %v589, 0.01
      %v600 = vsel %vm592, %v574, %v596
      %v601 = vsel %vm593, %v579, %v597
      %v602 = vsel %vm594, %v584, %v598
      %v603 = vsel %vm595, %v589, %v599
      %v604 = vld [vmem:[%s4] sm:$0xff]
      %v605 = vld [vmem:[%s4 + $0x8] sm:$0xff]
      %v606 = vld [vmem:[%s4 + $0x10] sm:$0xff]
      %v607 = vld [vmem:[%s4 + $0x18] sm:$0xff]
      %v608 = vld [vmem:[%s4 + $0x20] sm:$0xff]
      %v609 = vld [vmem:[%s4 + $0x28] sm:$0xff]
      %v610 = vld [vmem:[%s4 + $0x30] sm:$0xff]
      %v611 = vld [vmem:[%s4 + $0x38] sm:$0xff]
      %v612 = vld [vmem:[%s4 + $0x40] sm:$0xff]
      %v613 = vld [vmem:[%s4 + $0x48] sm:$0xff]
      %v614 = vld [vmem:[%s4 + $0x50] sm:$0xff]
      %v615 = vld [vmem:[%s4 + $0x58] sm:$0xff]
      %v616 = vld [vmem:[%s4 + $0x60] sm:$0xff]
      %v617 = vld [vmem:[%s4 + $0x68] sm:$0xff]
      %v618 = vld [vmem:[%s4 + $0x70] sm:$0xff]
      %v619 = vld [vmem:[%s4 + $0x78] sm:$0xff]
      %v620 = vld [vmem:[%s4 + $0x80] sm:$0xff]
      %v621 = vld [vmem:[%s4 + $0x88] sm:$0xff]
      %v622 = vld [vmem:[%s4 + $0x90] sm:$0xff]
      %v623 = vld [vmem:[%s4 + $0x98] sm:$0xff]
      %v624 = vld [vmem:[%s4 + $0xa0] sm:$0xff]
      %v625 = vld [vmem:[%s4 + $0xa8] sm:$0xff]
      %v626 = vld [vmem:[%s4 + $0xb0] sm:$0xff]
      %v627 = vld [vmem:[%s4 + $0xb8] sm:$0xff]
      %v628 = vld [vmem:[%s4 + $0xc0] sm:$0xff]
      %v629 = vld [vmem:[%s4 + $0xc8] sm:$0xff]
      %v630 = vld [vmem:[%s4 + $0xd0] sm:$0xff]
      %v631 = vld [vmem:[%s4 + $0xd8] sm:$0xff]
      %v632 = vld [vmem:[%s4 + $0xe0] sm:$0xff]
      %v633 = vld [vmem:[%s4 + $0xe8] sm:$0xff]
      %v634 = vld [vmem:[%s4 + $0xf0] sm:$0xff]
      %v635 = vld [vmem:[%s4 + $0xf8] sm:$0xff]
      %v636 = vld [vmem:[%s4 + $0x100] sm:$0xff]
      %v637 = vld [vmem:[%s4 + $0x108] sm:$0xff]
      %v638 = vld [vmem:[%s4 + $0x110] sm:$0xff]
      %v639 = vld [vmem:[%s4 + $0x118] sm:$0xff]
      %v640 = vld [vmem:[%s4 + $0x120] sm:$0xff]
      %v641 = vld [vmem:[%s4 + $0x128] sm:$0xff]
      %v642 = vld [vmem:[%s4 + $0x130] sm:$0xff]
      %v643 = vld [vmem:[%s4 + $0x138] sm:$0xff]
      %v644 = vld [vmem:[%s4 + $0x140] sm:$0xff]
      %v645 = vld [vmem:[%s4 + $0x148] sm:$0xff]
      %v646 = vld [vmem:[%s4 + $0x150] sm:$0xff]
      %v647 = vld [vmem:[%s4 + $0x158] sm:$0xff]
      %v648 = vld [vmem:[%s4 + $0x160] sm:$0xff]
      %v649 = vld [vmem:[%s4 + $0x168] sm:$0xff]
      %v650 = vld [vmem:[%s4 + $0x170] sm:$0xff]
      %v651 = vld [vmem:[%s4 + $0x178] sm:$0xff]
      %v652 = vld [vmem:[%s5] sm:$0x7]
      %v654 = vlaneseq
      %v655 = vshrl.u32 %v654, 7
      %v656 = vsub.s32 0, %v655
      %v657 = vrot.slane %v652, %v656
      %v658 = vlaneseq
      %v659 = vshrl.u32 %v658, 7
      %v660 = vsub.s32 1, %v659
      %v661 = vrot.slane %v652, %v660
      %v662 = vlaneseq
      %v663 = vshrl.u32 %v662, 7
      %v664 = vsub.s32 2, %v663
      %v665 = vrot.slane %v652, %v664
      %669 = vmatprep.subr.mxu0 %v605
      %670 = vmatpush1.msra.mxu0 %v604
      %671 = vmatprep.subr.mxu0 %v608
      %672 = vmatpush1.msra.mxu0 %v607
      %673 = vmatprep.subr.mxu0 %v611
      %674 = vmatpush1.msra.mxu0 %v610
      %675 = vmatprep.subr.mxu0 %v614
      %676 = vmatpush1.msra.mxu0 %v613
      %677 = vmatprep.subr.mxu0 %v617
      %678 = vmatpush1.msra.mxu0 %v616
      %679 = vmatprep.subr.mxu0 %v620
      %680 = vmatpush1.msra.mxu0 %v619
      %681 = vmatprep.subr.mxu0 %v623
      %682 = vmatpush1.msra.mxu0 %v622
      %683 = vmatprep.subr.mxu0 %v626
      %684 = vmatpush1.msra.mxu0 %v625
      %685 = vmatprep.subr.mxu0 %v629
      %686 = vmatpush1.msra.mxu0 %v628
      %687 = vmatprep.subr.mxu0 %v632
      %688 = vmatpush1.msra.mxu0 %v631
      %689 = vmatprep.subr.mxu0 %v635
      %690 = vmatpush1.msra.mxu0 %v634
      %691 = vmatprep.subr.mxu0 %v638
      %692 = vmatpush1.msra.mxu0 %v637
      %693 = vmatprep.subr.mxu0 %v641
      %694 = vmatpush1.msra.mxu0 %v640
      %695 = vmatprep.subr.mxu0 %v644
      %696 = vmatpush1.msra.mxu0 %v643
      %697 = vmatprep.subr.mxu0 %v647
      %698 = vmatpush1.msra.mxu0 %v646
      %699 = vmatprep.subr.mxu0 %v650
      %700 = vmatpush1.msra.mxu0 %v649
      %701 = vmatprep.subr.mxu0 0.0
      %702 = vmatpush1.msra.mxu0 0.0
      %703 = vmatprep.subr.mxu0 0.0
      %704 = vmatpush1.msra.mxu0 0.0
      %705 = vmatprep.subr.mxu0 0.0
      %706 = vmatpush1.msra.mxu0 0.0
      %707 = vmatprep.subr.mxu0 0.0
      %708 = vmatpush1.msra.mxu0 0.0
      %709 = vmatprep.subr.mxu0 0.0
      %710 = vmatpush1.msra.mxu0 0.0
      %711 = vmatprep.subr.mxu0 0.0
      %712 = vmatpush1.msra.mxu0 0.0
      %713 = vmatprep.subr.mxu0 0.0
      %714 = vmatpush1.msra.mxu0 0.0
      %715 = vmatprep.subr.mxu0 0.0
      %716 = vmatpush1.msra.mxu0 0.0
      %717 = vmatprep.subr.mxu0 0.0
      %718 = vmatpush1.msra.mxu0 0.0
      %719 = vmatprep.subr.mxu0 0.0
      %720 = vmatpush1.msra.mxu0 0.0
      %721 = vmatprep.subr.mxu0 0.0
      %722 = vmatpush1.msra.mxu0 0.0
      %723 = vmatprep.subr.mxu0 0.0
      %724 = vmatpush1.msra.mxu0 0.0
      %725 = vmatprep.subr.mxu0 0.0
      %726 = vmatpush1.msra.mxu0 0.0
      %727 = vmatprep.subr.mxu0 0.0
      %728 = vmatpush1.msra.mxu0 0.0
      %729 = vmatprep.subr.mxu0 0.0
      %730 = vmatpush1.msra.mxu0 0.0
      %731 = vmatprep.subr.mxu0 0.0
      %732 = vmatpush1.msra.mxu0 0.0
      %733 = vmatprep.mubr.f32.mxu0 0.0
      %734 = vmatmul.mubr.f32.gmra.mrb[0].mxu0 %v600
      %v735 = vpop.f32.mrb[0].mxu0
      %v736 = vadd.f32 %v657, %v735
      %v737 = vpop.f32.mrb[0].mxu0
      %v738 = vadd.f32 %v661, %v737
      %739 = vmatprep.mubr.f32.mxu0 0.0
      %740 = vmatmul.mubr.f32.gmra.mrb[0].mxu0 %v601
      %v741 = vpop.f32.mrb[0].mxu0
      %v742 = vadd.f32 %v657, %v741
      %v743 = vpop.f32.mrb[0].mxu0
      %v744 = vadd.f32 %v661, %v743
      %745 = vmatprep.mubr.f32.mxu0 0.0
      %746 = vmatmul.mubr.f32.gmra.mrb[0].mxu0 %v602
      %v747 = vpop.f32.mrb[0].mxu0
      %v748 = vadd.f32 %v657, %v747
      %v749 = vpop.f32.mrb[0].mxu0
      %v750 = vadd.f32 %v661, %v749
      %751 = vmatprep.mubr.f32.mxu0 0.0
      %752 = vmatmul.mubr.f32.gmra.mrb[0].mxu0 %v603
      %v753 = vpop.f32.mrb[0].mxu0
      %v754 = vadd.f32 %v657, %v753
      %v755 = vpop.f32.mrb[0].mxu0
      %v756 = vadd.f32 %v661, %v755
      %757 = vdwg.mxu0
      %758 = vmatprep.subr.mxu0 0.0
      %759 = vmatpush1.msra.mxu0 %v606
      %760 = vmatprep.subr.mxu0 0.0
      %761 = vmatpush1.msra.mxu0 %v609
      %762 = vmatprep.subr.mxu0 0.0
      %763 = vmatpush1.msra.mxu0 %v612
      %764 = vmatprep.subr.mxu0 0.0
      %765 = vmatpush1.msra.mxu0 %v615
      %766 = vmatprep.subr.mxu0 0.0
      %767 = vmatpush1.msra.mxu0 %v618
      %768 = vmatprep.subr.mxu0 0.0
      %769 = vmatpush1.msra.mxu0 %v621
      %770 = vmatprep.subr.mxu0 0.0
      %771 = vmatpush1.msra.mxu0 %v624
      %772 = vmatprep.subr.mxu0 0.0
      %773 = vmatpush1.msra.mxu0 %v627
      %774 = vmatprep.subr.mxu0 0.0
      %775 = vmatpush1.msra.mxu0 %v630
      %776 = vmatprep.subr.mxu0 0.0
      %777 = vmatpush1.msra.mxu0 %v633
      %778 = vmatprep.subr.mxu0 0.0
      %779 = vmatpush1.msra.mxu0 %v636
      %780 = vmatprep.subr.mxu0 0.0
      %781 = vmatpush1.msra.mxu0 %v639
      %782 = vmatprep.subr.mxu0 0.0
      %783 = vmatpush1.msra.mxu0 %v642
      %784 = vmatprep.subr.mxu0 0.0
      %785 = vmatpush1.msra.mxu0 %v645
      %786 = vmatprep.subr.mxu0 0.0
      %787 = vmatpush1.msra.mxu0 %v648
      %788 = vmatprep.subr.mxu0 0.0
      %789 = vmatpush1.msra.mxu0 %v651
      %790 = vmatprep.subr.mxu0 0.0
      %791 = vmatpush1.msra.mxu0 0.0
      %792 = vmatprep.subr.mxu0 0.0
      %793 = vmatpush1.msra.mxu0 0.0
      %794 = vmatprep.subr.mxu0 0.0
      %795 = vmatpush1.msra.mxu0 0.0
      %796 = vmatprep.subr.mxu0 0.0
      %797 = vmatpush1.msra.mxu0 0.0
      %798 = vmatprep.subr.mxu0 0.0
      %799 = vmatpush1.msra.mxu0 0.0
      %800 = vmatprep.subr.mxu0 0.0
      %801 = vmatpush1.msra.mxu0 0.0
      %802 = vmatprep.subr.mxu0 0.0
      %803 = vmatpush1.msra.mxu0 0.0
      %804 = vmatprep.subr.mxu0 0.0
      %805 = vmatpush1.msra.mxu0 0.0
      %806 = vmatprep.subr.mxu0 0.0
      %807 = vmatpush1.msra.mxu0 0.0
      %808 = vmatprep.subr.mxu0 0.0
      %809 = vmatpush1.msra.mxu0 0.0
      %810 = vmatprep.subr.mxu0 0.0
      %811 = vmatpush1.msra.mxu0 0.0
      %812 = vmatprep.subr.mxu0 0.0
      %813 = vmatpush1.msra.mxu0 0.0
      %814 = vmatprep.subr.mxu0 0.0
      %815 = vmatpush1.msra.mxu0 0.0
      %816 = vmatprep.subr.mxu0 0.0
      %817 = vmatpush1.msra.mxu0 0.0
      %818 = vmatprep.subr.mxu0 0.0
      %819 = vmatpush1.msra.mxu0 0.0
      %820 = vmatprep.subr.mxu0 0.0
      %821 = vmatpush1.msra.mxu0 0.0
      %822 = vmatprep.mubr.f32.mxu0 0.0
      %823 = vmatmul.mubr.f32.gmra.mrb[0].mxu0 %v600
      %v824 = vpop.f32.mrb[0].mxu0
      %v825 = vadd.f32 %v665, %v824
      %v826 = vpop.f32.mrb[0].mxu0
      %827 = vmatprep.mubr.f32.mxu0 0.0
      %828 = vmatmul.mubr.f32.gmra.mrb[0].mxu0 %v601
      %v829 = vpop.f32.mrb[0].mxu0
      %v830 = vadd.f32 %v665, %v829
      %v831 = vpop.f32.mrb[0].mxu0
      %832 = vmatprep.mubr.f32.mxu0 0.0
      %833 = vmatmul.mubr.f32.gmra.mrb[0].mxu0 %v602
      %v834 = vpop.f32.mrb[0].mxu0
      %v835 = vadd.f32 %v665, %v834
      %v836 = vpop.f32.mrb[0].mxu0
      %837 = vmatprep.mubr.f32.mxu0 0.0
      %838 = vmatmul.mubr.f32.gmra.mrb[0].mxu0 %v603
      %v839 = vpop.f32.mrb[0].mxu0
      %v840 = vadd.f32 %v665, %v839
      %v841 = vpop.f32.mrb[0].mxu0
      %842 = vdwg.mxu0
      %843 = vst [vmem:[#allocation3] sm:$0xff] %v736
      %844 = vst [vmem:[#allocation3 + $0x8] sm:$0xff] %v738
      %845 = vst [vmem:[#allocation3 + $0x10] sm:$0xff] %v825
      %846 = vst [vmem:[#allocation3 + $0x18] sm:$0xff] %v742
      %847 = vst [vmem:[#allocation3 + $0x20] sm:$0xff] %v744
      %848 = vst [vmem:[#allocation3 + $0x28] sm:$0xff] %v830
      %849 = vst [vmem:[#allocation3 + $0x30] sm:$0xff] %v748
      %850 = vst [vmem:[#allocation3 + $0x38] sm:$0xff] %v750
      %851 = vst [vmem:[#allocation3 + $0x40] sm:$0xff] %v835
      %852 = vst [vmem:[#allocation3 + $0x48] sm:$0xff] %v754
      %853 = vst [vmem:[#allocation3 + $0x50] sm:$0xff] %v756
      %854 = vst [vmem:[#allocation3 + $0x58] sm:$0xff] %v840
      %v855 = vld [vmem:[%s6] sm:$0xff]
      %v856 = vld [vmem:[%s6 + $0x8] sm:$0xff]
      %v857 = vld [vmem:[%s6 + $0x10] sm:$0xff]
      %v858 = vld [vmem:[%s6 + $0x18] sm:$0xff]
      %v859 = vld [vmem:[%s6 + $0x20] sm:$0xff]
      %v860 = vld [vmem:[%s6 + $0x28] sm:$0xff]
      %v861 = vld [vmem:[%s6 + $0x30] sm:$0xff]
      %v862 = vld [vmem:[%s6 + $0x38] sm:$0xff]
      %v863 = vld [vmem:[%s6 + $0x40] sm:$0xff]
      %v864 = vld [vmem:[%s6 + $0x48] sm:$0xff]
      %v865 = vld [vmem:[%s6 + $0x50] sm:$0xff]
      %v866 = vld [vmem:[%s6 + $0x58] sm:$0xff]
      %v867 = vld [vmem:[%s6 + $0x60] sm:$0xff]
      %v868 = vld [vmem:[%s6 + $0x68] sm:$0xff]
      %v869 = vld [vmem:[%s6 + $0x70] sm:$0xff]
      %v870 = vld [vmem:[%s6 + $0x78] sm:$0xff]
      %v871 = vld [vmem:[%s6 + $0x80] sm:$0xff]
      %v872 = vld [vmem:[%s6 + $0x88] sm:$0xff]
      %v873 = vld [vmem:[%s6 + $0x90] sm:$0xff]
      %v874 = vld [vmem:[%s6 + $0x98] sm:$0xff]
      %v875 = vld [vmem:[%s6 + $0xa0] sm:$0xff]
      %v876 = vld [vmem:[%s6 + $0xa8] sm:$0xff]
      %v877 = vld [vmem:[%s6 + $0xb0] sm:$0xff]
      %v878 = vld [vmem:[%s6 + $0xb8] sm:$0xff]
      %v879 = vld [vmem:[%s6 + $0xc0] sm:$0xff]
      %v880 = vld [vmem:[%s6 + $0xc8] sm:$0xff]
      %v881 = vld [vmem:[%s6 + $0xd0] sm:$0xff]
      %v882 = vld [vmem:[%s6 + $0xd8] sm:$0xff]
      %v883 = vld [vmem:[%s6 + $0xe0] sm:$0xff]
      %v884 = vld [vmem:[%s6 + $0xe8] sm:$0xff]
      %v885 = vld [vmem:[%s6 + $0xf0] sm:$0xff]
      %v886 = vld [vmem:[%s6 + $0xf8] sm:$0xff]
      %v887 = vld [vmem:[%s6 + $0x100] sm:$0xff]
      %v888 = vld [vmem:[%s6 + $0x108] sm:$0xff]
      %v889 = vld [vmem:[%s6 + $0x110] sm:$0xff]
      %v890 = vld [vmem:[%s6 + $0x118] sm:$0xff]
      %v891 = vld [vmem:[%s6 + $0x120] sm:$0xff]
      %v892 = vld [vmem:[%s6 + $0x128] sm:$0xff]
      %v893 = vld [vmem:[%s6 + $0x130] sm:$0xff]
      %v894 = vld [vmem:[%s6 + $0x138] sm:$0xff]
      %v895 = vld [vmem:[%s6 + $0x140] sm:$0xff]
      %v896 = vld [vmem:[%s6 + $0x148] sm:$0xff]
      %v897 = vld [vmem:[%s6 + $0x150] sm:$0xff]
      %v898 = vld [vmem:[%s6 + $0x158] sm:$0xff]
      %v899 = vld [vmem:[%s6 + $0x160] sm:$0xff]
      %v900 = vld [vmem:[%s6 + $0x168] sm:$0xff]
      %v901 = vld [vmem:[%s6 + $0x170] sm:$0xff]
      %v902 = vld [vmem:[%s6 + $0x178] sm:$0xff]
      %v903 = vld [vmem:[%s7] sm:$0x1]
      %v905 = vlaneseq
      %v906 = vshrl.u32 %v905, 7
      %v907 = vsub.s32 0, %v906
      %v908 = vrot.slane %v903, %v907
      %v910 = vld [vmem:[#allocation2] sm:$0xff]
      %911 = vmatprep.subr.mxu0 %v856
      %912 = vmatpush1.msra.mxu0 %v855
      %913 = vmatprep.subr.mxu0 %v859
      %914 = vmatpush1.msra.mxu0 %v858
      %915 = vmatprep.subr.mxu0 %v862
      %916 = vmatpush1.msra.mxu0 %v861
      %917 = vmatprep.subr.mxu0 %v865
      %918 = vmatpush1.msra.mxu0 %v864
      %919 = vmatprep.subr.mxu0 %v868
      %920 = vmatpush1.msra.mxu0 %v867
      %921 = vmatprep.subr.mxu0 %v871
      %922 = vmatpush1.msra.mxu0 %v870
      %923 = vmatprep.subr.mxu0 %v874
      %924 = vmatpush1.msra.mxu0 %v873
      %925 = vmatprep.subr.mxu0 %v877
      %926 = vmatpush1.msra.mxu0 %v876
      %927 = vmatprep.subr.mxu0 %v880
      %928 = vmatpush1.msra.mxu0 %v879
      %929 = vmatprep.subr.mxu0 %v883
      %930 = vmatpush1.msra.mxu0 %v882
      %931 = vmatprep.subr.mxu0 %v886
      %932 = vmatpush1.msra.mxu0 %v885
      %933 = vmatprep.subr.mxu0 %v889
      %934 = vmatpush1.msra.mxu0 %v888
      %935 = vmatprep.subr.mxu0 %v892
      %936 = vmatpush1.msra.mxu0 %v891
      %937 = vmatprep.subr.mxu0 %v895
      %938 = vmatpush1.msra.mxu0 %v894
      %939 = vmatprep.subr.mxu0 %v898
      %940 = vmatpush1.msra.mxu0 %v897
      %941 = vmatprep.subr.mxu0 %v901
      %942 = vmatpush1.msra.mxu0 %v900
      %943 = vmatprep.subr.mxu0 0.0
      %944 = vmatpush1.msra.mxu0 0.0
      %945 = vmatprep.subr.mxu0 0.0
      %946 = vmatpush1.msra.mxu0 0.0
      %947 = vmatprep.subr.mxu0 0.0
      %948 = vmatpush1.msra.mxu0 0.0
      %949 = vmatprep.subr.mxu0 0.0
      %950 = vmatpush1.msra.mxu0 0.0
      %951 = vmatprep.subr.mxu0 0.0
      %952 = vmatpush1.msra.mxu0 0.0
      %953 = vmatprep.subr.mxu0 0.0
      %954 = vmatpush1.msra.mxu0 0.0
      %955 = vmatprep.subr.mxu0 0.0
      %956 = vmatpush1.msra.mxu0 0.0
      %957 = vmatprep.subr.mxu0 0.0
      %958 = vmatpush1.msra.mxu0 0.0
      %959 = vmatprep.subr.mxu0 0.0
      %960 = vmatpush1.msra.mxu0 0.0
      %961 = vmatprep.subr.mxu0 0.0
      %962 = vmatpush1.msra.mxu0 0.0
      %963 = vmatprep.subr.mxu0 0.0
      %964 = vmatpush1.msra.mxu0 0.0
      %965 = vmatprep.subr.mxu0 0.0
      %966 = vmatpush1.msra.mxu0 0.0
      %967 = vmatprep.subr.mxu0 0.0
      %968 = vmatpush1.msra.mxu0 0.0
      %969 = vmatprep.subr.mxu0 0.0
      %970 = vmatpush1.msra.mxu0 0.0
      %971 = vmatprep.subr.mxu0 0.0
      %972 = vmatpush1.msra.mxu0 0.0
      %973 = vmatprep.subr.mxu0 0.0
      %974 = vmatpush1.msra.mxu0 0.0
      %975 = vmatprep.mubr.f32.mxu0 0.0
      %976 = vmatmul.mubr.f32.gmra.mrb[0].mxu0 %v910
      %v977 = vpop.f32.mrb[0].mxu0
      %v978 = vadd.f32 0.0, %v977
      %v979 = vpop.f32.mrb[0].mxu0
      %v980 = vadd.f32 0.0, %v979
      %981 = vdwg.mxu0
      %982 = vmatprep.subr.mxu0 0.0
      %983 = vmatpush1.msra.mxu0 %v857
      %984 = vmatprep.subr.mxu0 0.0
      %985 = vmatpush1.msra.mxu0 %v860
      %986 = vmatprep.subr.mxu0 0.0
      %987 = vmatpush1.msra.mxu0 %v863
      %988 = vmatprep.subr.mxu0 0.0
      %989 = vmatpush1.msra.mxu0 %v866
      %990 = vmatprep.subr.mxu0 0.0
      %991 = vmatpush1.msra.mxu0 %v869
      %992 = vmatprep.subr.mxu0 0.0
      %993 = vmatpush1.msra.mxu0 %v872
      %994 = vmatprep.subr.mxu0 0.0
      %995 = vmatpush1.msra.mxu0 %v875
      %996 = vmatprep.subr.mxu0 0.0
      %997 = vmatpush1.msra.mxu0 %v878
      %998 = vmatprep.subr.mxu0 0.0
      %999 = vmatpush1.msra.mxu0 %v881
      %1000 = vmatprep.subr.mxu0 0.0
      %1001 = vmatpush1.msra.mxu0 %v884
      %1002 = vmatprep.subr.mxu0 0.0
      %1003 = vmatpush1.msra.mxu0 %v887
      %1004 = vmatprep.subr.mxu0 0.0
      %1005 = vmatpush1.msra.mxu0 %v890
      %1006 = vmatprep.subr.mxu0 0.0
      %1007 = vmatpush1.msra.mxu0 %v893
      %1008 = vmatprep.subr.mxu0 0.0
      %1009 = vmatpush1.msra.mxu0 %v896
      %1010 = vmatprep.subr.mxu0 0.0
      %1011 = vmatpush1.msra.mxu0 %v899
      %1012 = vmatprep.subr.mxu0 0.0
      %1013 = vmatpush1.msra.mxu0 %v902
      %1014 = vmatprep.subr.mxu0 0.0
      %1015 = vmatpush1.msra.mxu0 0.0
      %1016 = vmatprep.subr.mxu0 0.0
      %1017 = vmatpush1.msra.mxu0 0.0
      %1018 = vmatprep.subr.mxu0 0.0
      %1019 = vmatpush1.msra.mxu0 0.0
      %1020 = vmatprep.subr.mxu0 0.0
      %1021 = vmatpush1.msra.mxu0 0.0
      %1022 = vmatprep.subr.mxu0 0.0
      %1023 = vmatpush1.msra.mxu0 0.0
      %1024 = vmatprep.subr.mxu0 0.0
      %1025 = vmatpush1.msra.mxu0 0.0
      %1026 = vmatprep.subr.mxu0 0.0
      %1027 = vmatpush1.msra.mxu0 0.0
      %1028 = vmatprep.subr.mxu0 0.0
      %1029 = vmatpush1.msra.mxu0 0.0
      %1030 = vmatprep.subr.mxu0 0.0
      %1031 = vmatpush1.msra.mxu0 0.0
      %1032 = vmatprep.subr.mxu0 0.0
      %1033 = vmatpush1.msra.mxu0 0.0
      %1034 = vmatprep.subr.mxu0 0.0
      %1035 = vmatpush1.msra.mxu0 0.0
      %1036 = vmatprep.subr.mxu0 0.0
      %1037 = vmatpush1.msra.mxu0 0.0
      %1038 = vmatprep.subr.mxu0 0.0
      %1039 = vmatpush1.msra.mxu0 0.0
      %1040 = vmatprep.subr.mxu0 0.0
      %1041 = vmatpush1.msra.mxu0 0.0
      %1042 = vmatprep.subr.mxu0 0.0
      %1043 = vmatpush1.msra.mxu0 0.0
      %1044 = vmatprep.subr.mxu0 0.0
      %1045 = vmatpush1.msra.mxu0 0.0
      %1046 = vmatprep.mubr.f32.mxu0 0.0
      %1047 = vmatmul.mubr.f32.gmra.mrb[0].mxu0 %v910
      %v1048 = vpop.f32.mrb[0].mxu0
      %v1049 = vadd.f32 0.0, %v1048
      %v1050 = vpop.f32.mrb[0].mxu0
      %1051 = vdwg.mxu0
      %v1052 = vld [vmem:[#allocation3] sm:$0xff]
      %v1053 = vld [vmem:[#allocation3 + $0x8] sm:$0xff]
      %v1054 = vld [vmem:[#allocation3 + $0x10] sm:$0xff]
      %v1055 = vadd.f32 %v1052, %v978
      %v1056 = vxor.u32 %v1055, 2147483648
      %v1057 = vmul.f32 %v1056, 1.442695
      %v1058 = vpow.pop %v1057
      %v1059 = vadd.f32 %v1058, 1.0
      %v1060 = vrcp.pop %v1059
      %v1061 = vmul.f32 1.0, %v1060
      %v1062 = vadd.f32 %v1053, %v980
      %v1063 = vxor.u32 %v1062, 2147483648
      %v1064 = vmul.f32 %v1063, 1.442695
      %v1065 = vpow.pop %v1064
      %v1066 = vadd.f32 %v1065, 1.0
      %v1067 = vrcp.pop %v1066
      %v1068 = vmul.f32 1.0, %v1067
      %v1069 = vadd.f32 %v1049, %v908
      %v1070 = vmul.f32 %v1061, %v1069
      %v1071 = vadd.f32 %v1054, %v1070
      %v1072 = vtanh.pop %v1071
      %v1073 = vsub.f32 1.0, %v1068
      %v1074 = vmul.f32 %v1073, %v1072
      %v1075 = vmul.f32 %v1068, %v910
      %v1076 = vadd.f32 %v1074, %v1075
      %1077 = vst [vmem:[#allocation4] sm:$0xff] %v1076
      %1078 = vmatprep.subr.mxu0 %v856
      %1079 = vmatpush1.msra.mxu0 %v855
      %1080 = vmatprep.subr.mxu0 %v859
      %1081 = vmatpush1.msra.mxu0 %v858
      %1082 = vmatprep.subr.mxu0 %v862
      %1083 = vmatpush1.msra.mxu0 %v861
      %1084 = vmatprep.subr.mxu0 %v865
      %1085 = vmatpush1.msra.mxu0 %v864
      %1086 = vmatprep.subr.mxu0 %v868
      %1087 = vmatpush1.msra.mxu0 %v867
      %1088 = vmatprep.subr.mxu0 %v871
      %1089 = vmatpush1.msra.mxu0 %v870
      %1090 = vmatprep.subr.mxu0 %v874
      %1091 = vmatpush1.msra.mxu0 %v873
      %1092 = vmatprep.subr.mxu0 %v877
      %1093 = vmatpush1.msra.mxu0 %v876
      %1094 = vmatprep.subr.mxu0 %v880
      %1095 = vmatpush1.msra.mxu0 %v879
      %1096 = vmatprep.subr.mxu0 %v883
      %1097 = vmatpush1.msra.mxu0 %v882
      %1098 = vmatprep.subr.mxu0 %v886
      %1099 = vmatpush1.msra.mxu0 %v885
      %1100 = vmatprep.subr.mxu0 %v889
      %1101 = vmatpush1.msra.mxu0 %v888
      %1102 = vmatprep.subr.mxu0 %v892
      %1103 = vmatpush1.msra.mxu0 %v891
      %1104 = vmatprep.subr.mxu0 %v895
      %1105 = vmatpush1.msra.mxu0 %v894
      %1106 = vmatprep.subr.mxu0 %v898
      %1107 = vmatpush1.msra.mxu0 %v897
      %1108 = vmatprep.subr.mxu0 %v901
      %1109 = vmatpush1.msra.mxu0 %v900
      %1110 = vmatprep.subr.mxu0 0.0
      %1111 = vmatpush1.msra.mxu0 0.0
      %1112 = vmatprep.subr.mxu0 0.0
      %1113 = vmatpush1.msra.mxu0 0.0
      %1114 = vmatprep.subr.mxu0 0.0
      %1115 = vmatpush1.msra.mxu0 0.0
      %1116 = vmatprep.subr.mxu0 0.0
      %1117 = vmatpush1.msra.mxu0 0.0
      %1118 = vmatprep.subr.mxu0 0.0
      %1119 = vmatpush1.msra.mxu0 0.0
      %1120 = vmatprep.subr.mxu0 0.0
      %1121 = vmatpush1.msra.mxu0 0.0
      %1122 = vmatprep.subr.mxu0 0.0
      %1123 = vmatpush1.msra.mxu0 0.0
      %1124 = vmatprep.subr.mxu0 0.0
      %1125 = vmatpush1.msra.mxu0 0.0
      %1126 = vmatprep.subr.mxu0 0.0
      %1127 = vmatpush1.msra.mxu0 0.0
      %1128 = vmatprep.subr.mxu0 0.0
      %1129 = vmatpush1.msra.mxu0 0.0
      %1130 = vmatprep.subr.mxu0 0.0
      %1131 = vmatpush1.msra.mxu0 0.0
      %1132 = vmatprep.subr.mxu0 0.0
      %1133 = vmatpush1.msra.mxu0 0.0
      %1134 = vmatprep.subr.mxu0 0.0
      %1135 = vmatpush1.msra.mxu0 0.0
      %1136 = vmatprep.subr.mxu0 0.0
      %1137 = vmatpush1.msra.mxu0 0.0
      %1138 = vmatprep.subr.mxu0 0.0
      %1139 = vmatpush1.msra.mxu0 0.0
      %1140 = vmatprep.subr.mxu0 0.0
      %1141 = vmatpush1.msra.mxu0 0.0
      %1142 = vmatprep.mubr.f32.mxu0 0.0
      %1143 = vmatmul.mubr.f32.gmra.mrb[0].mxu0 %v1076
      %v1144 = vpop.f32.mrb[0].mxu0
      %v1145 = vadd.f32 0.0, %v1144
      %v1146 = vpop.f32.mrb[0].mxu0
      %v1147 = vadd.f32 0.0, %v1146
      %1148 = vdwg.mxu0
      %1149 = vmatprep.subr.mxu0 0.0
      %1150 = vmatpush1.msra.mxu0 %v857
      %1151 = vmatprep.subr.mxu0 0.0
      %1152 = vmatpush1.msra.mxu0 %v860
      %1153 = vmatprep.subr.mxu0 0.0
      %1154 = vmatpush1.msra.mxu0 %v863
      %1155 = vmatprep.subr.mxu0 0.0
      %1156 = vmatpush1.msra.mxu0 %v866
      %1157 = vmatprep.subr.mxu0 0.0
      %1158 = vmatpush1.msra.mxu0 %v869
      %1159 = vmatprep.subr.mxu0 0.0
      %1160 = vmatpush1.msra.mxu0 %v872
      %1161 = vmatprep.subr.mxu0 0.0
      %1162 = vmatpush1.msra.mxu0 %v875
      %1163 = vmatprep.subr.mxu0 0.0
      %1164 = vmatpush1.msra.mxu0 %v878
      %1165 = vmatprep.subr.mxu0 0.0
      %1166 = vmatpush1.msra.mxu0 %v881
      %1167 = vmatprep.subr.mxu0 0.0
      %1168 = vmatpush1.msra.mxu0 %v884
      %1169 = vmatprep.subr.mxu0 0.0
      %1170 = vmatpush1.msra.mxu0 %v887
      %1171 = vmatprep.subr.mxu0 0.0
      %1172 = vmatpush1.msra.mxu0 %v890
      %1173 = vmatprep.subr.mxu0 0.0
      %1174 = vmatpush1.msra.mxu0 %v893
      %1175 = vmatprep.subr.mxu0 0.0
      %1176 = vmatpush1.msra.mxu0 %v896
      %1177 = vmatprep.subr.mxu0 0.0
      %1178 = vmatpush1.msra.mxu0 %v899
      %1179 = vmatprep.subr.mxu0 0.0
      %1180 = vmatpush1.msra.mxu0 %v902
      %1181 = vmatprep.subr.mxu0 0.0
      %1182 = vmatpush1.msra.mxu0 0.0
      %1183 = vmatprep.subr.mxu0 0.0
      %1184 = vmatpush1.msra.mxu0 0.0
      %1185 = vmatprep.subr.mxu0 0.0
      %1186 = vmatpush1.msra.mxu0 0.0
      %1187 = vmatprep.subr.mxu0 0.0
      %1188 = vmatpush1.msra.mxu0 0.0
      %1189 = vmatprep.subr.mxu0 0.0
      %1190 = vmatpush1.msra.mxu0 0.0
      %1191 = vmatprep.subr.mxu0 0.0
      %1192 = vmatpush1.msra.mxu0 0.0
      %1193 = vmatprep.subr.mxu0 0.0
      %1194 = vmatpush1.msra.mxu0 0.0
      %1195 = vmatprep.subr.mxu0 0.0
      %1196 = vmatpush1.msra.mxu0 0.0
      %1197 = vmatprep.subr.mxu0 0.0
      %1198 = vmatpush1.msra.mxu0 0.0
      %1199 = vmatprep.subr.mxu0 0.0
      %1200 = vmatpush1.msra.mxu0 0.0
      %1201 = vmatprep.subr.mxu0 0.0
      %1202 = vmatpush1.msra.mxu0 0.0
      %1203 = vmatprep.subr.mxu0 0.0
      %1204 = vmatpush1.msra.mxu0 0.0
      %1205 = vmatprep.subr.mxu0 0.0
      %1206 = vmatpush1.msra.mxu0 0.0
      %1207 = vmatprep.subr.mxu0 0.0
      %1208 = vmatpush1.msra.mxu0 0.0
      %1209 = vmatprep.subr.mxu0 0.0
      %1210 = vmatpush1.msra.mxu0 0.0
      %1211 = vmatprep.subr.mxu0 0.0
      %1212 = vmatpush1.msra.mxu0 0.0
      %1213 = vmatprep.mubr.f32.mxu0 0.0
      %1214 = vmatmul.mubr.f32.gmra.mrb[0].mxu0 %v1076
      %v1215 = vpop.f32.mrb[0].mxu0
      %v1216 = vadd.f32 0.0, %v1215
      %v1217 = vpop.f32.mrb[0].mxu0
      %1218 = vdwg.mxu0
      %s1219 = scalar_lea.vmem [#allocation3], 24
      %v1220 = vld [vmem:[%s1219] sm:$0xff]
      %v1221 = vld [vmem:[%s1219 + $0x8] sm:$0xff]
      %v1222 = vld [vmem:[%s1219 + $0x10] sm:$0xff]
      %v1223 = vadd.f32 %v1220, %v1145
      %v1224 = vxor.u32 %v1223, 2147483648
      %v1225 = vmul.f32 %v1224, 1.442695
      %v1226 = vpow.pop %v1225
      %v1227 = vadd.f32 %v1226, 1.0
      %v1228 = vrcp.pop %v1227
      %v1229 = vmul.f32 1.0, %v1228
      %v1230 = vadd.f32 %v1221, %v1147
      %v1231 = vxor.u32 %v1230, 2147483648
      %v1232 = vmul.f32 %v1231, 1.442695
      %v1233 = vpow.pop %v1232
      %v1234 = vadd.f32 %v1233, 1.0
      %v1235 = vrcp.pop %v1234
      %v1236 = vmul.f32 1.0, %v1235
      %v1237 = vadd.f32 %v1216, %v908
      %v1238 = vmul.f32 %v1229, %v1237
      %v1239 = vadd.f32 %v1222, %v1238
      %v1240 = vtanh.pop %v1239
      %v1241 = vsub.f32 1.0, %v1236
      %v1242 = vmul.f32 %v1241, %v1240
      %v1243 = vmul.f32 %v1236, %v1076
      %v1244 = vadd.f32 %v1242, %v1243
      %s1245 = scalar_lea.vmem [#allocation4], 8
      %1246 = vst [vmem:[%s1245] sm:$0xff] %v1244
      %1247 = vmatprep.subr.mxu0 %v856
      %1248 = vmatpush1.msra.mxu0 %v855
      %1249 = vmatprep.subr.mxu0 %v859
      %1250 = vmatpush1.msra.mxu0 %v858
      %1251 = vmatprep.subr.mxu0 %v862
      %1252 = vmatpush1.msra.mxu0 %v861
      %1253 = vmatprep.subr.mxu0 %v865
      %1254 = vmatpush1.msra.mxu0 %v864
      %1255 = vmatprep.subr.mxu0 %v868
      %1256 = vmatpush1.msra.mxu0 %v867
      %1257 = vmatprep.subr.mxu0 %v871
      %1258 = vmatpush1.msra.mxu0 %v870
      %1259 = vmatprep.subr.mxu0 %v874
      %1260 = vmatpush1.msra.mxu0 %v873
      %1261 = vmatprep.subr.mxu0 %v877
      %1262 = vmatpush1.msra.mxu0 %v876
      %1263 = vmatprep.subr.mxu0 %v880
      %1264 = vmatpush1.msra.mxu0 %v879
      %1265 = vmatprep.subr.mxu0 %v883
      %1266 = vmatpush1.msra.mxu0 %v882
      %1267 = vmatprep.subr.mxu0 %v886
      %1268 = vmatpush1.msra.mxu0 %v885
      %1269 = vmatprep.subr.mxu0 %v889
      %1270 = vmatpush1.msra.mxu0 %v888
      %1271 = vmatprep.subr.mxu0 %v892
      %1272 = vmatpush1.msra.mxu0 %v891
      %1273 = vmatprep.subr.mxu0 %v895
      %1274 = vmatpush1.msra.mxu0 %v894
      %1275 = vmatprep.subr.mxu0 %v898
      %1276 = vmatpush1.msra.mxu0 %v897
      %1277 = vmatprep.subr.mxu0 %v901
      %1278 = vmatpush1.msra.mxu0 %v900
      %1279 = vmatprep.subr.mxu0 0.0
      %1280 = vmatpush1.msra.mxu0 0.0
      %1281 = vmatprep.subr.mxu0 0.0
      %1282 = vmatpush1.msra.mxu0 0.0
      %1283 = vmatprep.subr.mxu0 0.0
      %1284 = vmatpush1.msra.mxu0 0.0
      %1285 = vmatprep.subr.mxu0 0.0
      %1286 = vmatpush1.msra.mxu0 0.0
      %1287 = vmatprep.subr.mxu0 0.0
      %1288 = vmatpush1.msra.mxu0 0.0
      %1289 = vmatprep.subr.mxu0 0.0
      %1290 = vmatpush1.msra.mxu0 0.0
      %1291 = vmatprep.subr.mxu0 0.0
      %1292 = vmatpush1.msra.mxu0 0.0
      %1293 = vmatprep.subr.mxu0 0.0
      %1294 = vmatpush1.msra.mxu0 0.0
      %1295 = vmatprep.subr.mxu0 0.0
      %1296 = vmatpush1.msra.mxu0 0.0
      %1297 = vmatprep.subr.mxu0 0.0
      %1298 = vmatpush1.msra.mxu0 0.0
      %1299 = vmatprep.subr.mxu0 0.0
      %1300 = vmatpush1.msra.mxu0 0.0
      %1301 = vmatprep.subr.mxu0 0.0
      %1302 = vmatpush1.msra.mxu0 0.0
      %1303 = vmatprep.subr.mxu0 0.0
      %1304 = vmatpush1.msra.mxu0 0.0
      %1305 = vmatprep.subr.mxu0 0.0
      %1306 = vmatpush1.msra.mxu0 0.0
      %1307 = vmatprep.subr.mxu0 0.0
      %1308 = vmatpush1.msra.mxu0 0.0
      %1309 = vmatprep.subr.mxu0 0.0
      %1310 = vmatpush1.msra.mxu0 0.0
      %1311 = vmatprep.mubr.f32.mxu0 0.0
      %1312 = vmatmul.mubr.f32.gmra.mrb[0].mxu0 %v1244
      %v1313 = vpop.f32.mrb[0].mxu0
      %v1314 = vadd.f32 0.0, %v1313
      %v1315 = vpop.f32.mrb[0].mxu0
      %v1316 = vadd.f32 0.0, %v1315
      %1317 = vdwg.mxu0
      %1318 = vmatprep.subr.mxu0 0.0
      %1319 = vmatpush1.msra.mxu0 %v857
      %1320 = vmatprep.subr.mxu0 0.0
      %1321 = vmatpush1.msra.mxu0 %v860
      %1322 = vmatprep.subr.mxu0 0.0
      %1323 = vmatpush1.msra.mxu0 %v863
      %1324 = vmatprep.subr.mxu0 0.0
      %1325 = vmatpush1.msra.mxu0 %v866
      %1326 = vmatprep.subr.mxu0 0.0
      %1327 = vmatpush1.msra.mxu0 %v869
      %1328 = vmatprep.subr.mxu0 0.0
      %1329 = vmatpush1.msra.mxu0 %v872
      %1330 = vmatprep.subr.mxu0 0.0
      %1331 = vmatpush1.msra.mxu0 %v875
      %1332 = vmatprep.subr.mxu0 0.0
      %1333 = vmatpush1.msra.mxu0 %v878
      %1334 = vmatprep.subr.mxu0 0.0
      %1335 = vmatpush1.msra.mxu0 %v881
      %1336 = vmatprep.subr.mxu0 0.0
      %1337 = vmatpush1.msra.mxu0 %v884
      %1338 = vmatprep.subr.mxu0 0.0
      %1339 = vmatpush1.msra.mxu0 %v887
      %1340 = vmatprep.subr.mxu0 0.0
      %1341 = vmatpush1.msra.mxu0 %v890
      %1342 = vmatprep.subr.mxu0 0.0
      %1343 = vmatpush1.msra.mxu0 %v893
      %1344 = vmatprep.subr.mxu0 0.0
      %1345 = vmatpush1.msra.mxu0 %v896
      %1346 = vmatprep.subr.mxu0 0.0
      %1347 = vmatpush1.msra.mxu0 %v899
      %1348 = vmatprep.subr.mxu0 0.0
      %1349 = vmatpush1.msra.mxu0 %v902
      %1350 = vmatprep.subr.mxu0 0.0
      %1351 = vmatpush1.msra.mxu0 0.0
      %1352 = vmatprep.subr.mxu0 0.0
      %1353 = vmatpush1.msra.mxu0 0.0
      %1354 = vmatprep.subr.mxu0 0.0
      %1355 = vmatpush1.msra.mxu0 0.0
      %1356 = vmatprep.subr.mxu0 0.0
      %1357 = vmatpush1.msra.mxu0 0.0
      %1358 = vmatprep.subr.mxu0 0.0
      %1359 = vmatpush1.msra.mxu0 0.0
      %1360 = vmatprep.subr.mxu0 0.0
      %1361 = vmatpush1.msra.mxu0 0.0
      %1362 = vmatprep.subr.mxu0 0.0
      %1363 = vmatpush1.msra.mxu0 0.0
      %1364 = vmatprep.subr.mxu0 0.0
      %1365 = vmatpush1.msra.mxu0 0.0
      %1366 = vmatprep.subr.mxu0 0.0
      %1367 = vmatpush1.msra.mxu0 0.0
      %1368 = vmatprep.subr.mxu0 0.0
      %1369 = vmatpush1.msra.mxu0 0.0
      %1370 = vmatprep.subr.mxu0 0.0
      %1371 = vmatpush1.msra.mxu0 0.0
      %1372 = vmatprep.subr.mxu0 0.0
      %1373 = vmatpush1.msra.mxu0 0.0
      %1374 = vmatprep.subr.mxu0 0.0
      %1375 = vmatpush1.msra.mxu0 0.0
      %1376 = vmatprep.subr.mxu0 0.0
      %1377 = vmatpush1.msra.mxu0 0.0
      %1378 = vmatprep.subr.mxu0 0.0
      %1379 = vmatpush1.msra.mxu0 0.0
      %1380 = vmatprep.subr.mxu0 0.0
      %1381 = vmatpush1.msra.mxu0 0.0
      %1382 = vmatprep.mubr.f32.mxu0 0.0
      %1383 = vmatmul.mubr.f32.gmra.mrb[0].mxu0 %v1244
      %v1384 = vpop.f32.mrb[0].mxu0
      %v1385 = vadd.f32 0.0, %v1384
      %v1386 = vpop.f32.mrb[0].mxu0
      %1387 = vdwg.mxu0
      %s1388 = scalar_lea.vmem [#allocation3], 48
      %v1389 = vld [vmem:[%s1388] sm:$0xff]
      %v1390 = vld [vmem:[%s1388 + $0x8] sm:$0xff]
      %v1391 = vld [vmem:[%s1388 + $0x10] sm:$0xff]
      %v1392 = vadd.f32 %v1389, %v1314
      %v1393 = vxor.u32 %v1392, 2147483648
      %v1394 = vmul.f32 %v1393, 1.442695
      %v1395 = vpow.pop %v1394
      %v1396 = vadd.f32 %v1395, 1.0
      %v1397 = vrcp.pop %v1396
      %v1398 = vmul.f32 1.0, %v1397
      %v1399 = vadd.f32 %v1390, %v1316
      %v1400 = vxor.u32 %v1399, 2147483648
      %v1401 = vmul.f32 %v1400, 1.442695
      %v1402 = vpow.pop %v1401
      %v1403 = vadd.f32 %v1402, 1.0
      %v1404 = vrcp.pop %v1403
      %v1405 = vmul.f32 1.0, %v1404
      %v1406 = vadd.f32 %v1385, %v908
      %v1407 = vmul.f32 %v1398, %v1406
      %v1408 = vadd.f32 %v1391, %v1407
      %v1409 = vtanh.pop %v1408
      %v1410 = vsub.f32 1.0, %v1405
      %v1411 = vmul.f32 %v1410, %v1409
      %v1412 = vmul.f32 %v1405, %v1244
      %v1413 = vadd.f32 %v1411, %v1412
      %s1414 = scalar_lea.vmem [#allocation4], 16
      %1415 = vst [vmem:[%s1414] sm:$0xff] %v1413
      %1416 = vmatprep.subr.mxu0 %v856
      %1417 = vmatpush1.msra.mxu0 %v855
      %1418 = vmatprep.subr.mxu0 %v859
      %1419 = vmatpush1.msra.mxu0 %v858
      %1420 = vmatprep.subr.mxu0 %v862
      %1421 = vmatpush1.msra.mxu0 %v861
      %1422 = vmatprep.subr.mxu0 %v865
      %1423 = vmatpush1.msra.mxu0 %v864
      %1424 = vmatprep.subr.mxu0 %v868
      %1425 = vmatpush1.msra.mxu0 %v867
      %1426 = vmatprep.subr.mxu0 %v871
      %1427 = vmatpush1.msra.mxu0 %v870
      %1428 = vmatprep.subr.mxu0 %v874
      %1429 = vmatpush1.msra.mxu0 %v873
      %1430 = vmatprep.subr.mxu0 %v877
      %1431 = vmatpush1.msra.mxu0 %v876
      %1432 = vmatprep.subr.mxu0 %v880
      %1433 = vmatpush1.msra.mxu0 %v879
      %1434 = vmatprep.subr.mxu0 %v883
      %1435 = vmatpush1.msra.mxu0 %v882
      %1436 = vmatprep.subr.mxu0 %v886
      %1437 = vmatpush1.msra.mxu0 %v885
      %1438 = vmatprep.subr.mxu0 %v889
      %1439 = vmatpush1.msra.mxu0 %v888
      %1440 = vmatprep.subr.mxu0 %v892
      %1441 = vmatpush1.msra.mxu0 %v891
      %1442 = vmatprep.subr.mxu0 %v895
      %1443 = vmatpush1.msra.mxu0 %v894
      %1444 = vmatprep.subr.mxu0 %v898
      %1445 = vmatpush1.msra.mxu0 %v897
      %1446 = vmatprep.subr.mxu0 %v901
      %1447 = vmatpush1.msra.mxu0 %v900
      %1448 = vmatprep.subr.mxu0 0.0
      %1449 = vmatpush1.msra.mxu0 0.0
      %1450 = vmatprep.subr.mxu0 0.0
      %1451 = vmatpush1.msra.mxu0 0.0
      %1452 = vmatprep.subr.mxu0 0.0
      %1453 = vmatpush1.msra.mxu0 0.0
      %1454 = vmatprep.subr.mxu0 0.0
      %1455 = vmatpush1.msra.mxu0 0.0
      %1456 = vmatprep.subr.mxu0 0.0
      %1457 = vmatpush1.msra.mxu0 0.0
      %1458 = vmatprep.subr.mxu0 0.0
      %1459 = vmatpush1.msra.mxu0 0.0
      %1460 = vmatprep.subr.mxu0 0.0
      %1461 = vmatpush1.msra.mxu0 0.0
      %1462 = vmatprep.subr.mxu0 0.0
      %1463 = vmatpush1.msra.mxu0 0.0
      %1464 = vmatprep.subr.mxu0 0.0
      %1465 = vmatpush1.msra.mxu0 0.0
      %1466 = vmatprep.subr.mxu0 0.0
      %1467 = vmatpush1.msra.mxu0 0.0
      %1468 = vmatprep.subr.mxu0 0.0
      %1469 = vmatpush1.msra.mxu0 0.0
      %1470 = vmatprep.subr.mxu0 0.0
      %1471 = vmatpush1.msra.mxu0 0.0
      %1472 = vmatprep.subr.mxu0 0.0
      %1473 = vmatpush1.msra.mxu0 0.0
      %1474 = vmatprep.subr.mxu0 0.0
      %1475 = vmatpush1.msra.mxu0 0.0
      %1476 = vmatprep.subr.mxu0 0.0
      %1477 = vmatpush1.msra.mxu0 0.0
      %1478 = vmatprep.subr.mxu0 0.0
      %1479 = vmatpush1.msra.mxu0 0.0
      %1480 = vmatprep.mubr.f32.mxu0 0.0
      %1481 = vmatmul.mubr.f32.gmra.mrb[0].mxu0 %v1413
      %v1482 = vpop.f32.mrb[0].mxu0
      %v1483 = vadd.f32 0.0, %v1482
      %v1484 = vpop.f32.mrb[0].mxu0
      %v1485 = vadd.f32 0.0, %v1484
      %1486 = vdwg.mxu0
      %1487 = vmatprep.subr.mxu0 0.0
      %1488 = vmatpush1.msra.mxu0 %v857
      %1489 = vmatprep.subr.mxu0 0.0
      %1490 = vmatpush1.msra.mxu0 %v860
      %1491 = vmatprep.subr.mxu0 0.0
      %1492 = vmatpush1.msra.mxu0 %v863
      %1493 = vmatprep.subr.mxu0 0.0
      %1494 = vmatpush1.msra.mxu0 %v866
      %1495 = vmatprep.subr.mxu0 0.0
      %1496 = vmatpush1.msra.mxu0 %v869
      %1497 = vmatprep.subr.mxu0 0.0
      %1498 = vmatpush1.msra.mxu0 %v872
      %1499 = vmatprep.subr.mxu0 0.0
      %1500 = vmatpush1.msra.mxu0 %v875
      %1501 = vmatprep.subr.mxu0 0.0
      %1502 = vmatpush1.msra.mxu0 %v878
      %1503 = vmatprep.subr.mxu0 0.0
      %1504 = vmatpush1.msra.mxu0 %v881
      %1505 = vmatprep.subr.mxu0 0.0
      %1506 = vmatpush1.msra.mxu0 %v884
      %1507 = vmatprep.subr.mxu0 0.0
      %1508 = vmatpush1.msra.mxu0 %v887
      %1509 = vmatprep.subr.mxu0 0.0
      %1510 = vmatpush1.msra.mxu0 %v890
      %1511 = vmatprep.subr.mxu0 0.0
      %1512 = vmatpush1.msra.mxu0 %v893
      %1513 = vmatprep.subr.mxu0 0.0
      %1514 = vmatpush1.msra.mxu0 %v896
      %1515 = vmatprep.subr.mxu0 0.0
      %1516 = vmatpush1.msra.mxu0 %v899
      %1517 = vmatprep.subr.mxu0 0.0
      %1518 = vmatpush1.msra.mxu0 %v902
      %1519 = vmatprep.subr.mxu0 0.0
      %1520 = vmatpush1.msra.mxu0 0.0
      %1521 = vmatprep.subr.mxu0 0.0
      %1522 = vmatpush1.msra.mxu0 0.0
      %1523 = vmatprep.subr.mxu0 0.0
      %1524 = vmatpush1.msra.mxu0 0.0
      %1525 = vmatprep.subr.mxu0 0.0
      %1526 = vmatpush1.msra.mxu0 0.0
      %1527 = vmatprep.subr.mxu0 0.0
      %1528 = vmatpush1.msra.mxu0 0.0
      %1529 = vmatprep.subr.mxu0 0.0
      %1530 = vmatpush1.msra.mxu0 0.0
      %1531 = vmatprep.subr.mxu0 0.0
      %1532 = vmatpush1.msra.mxu0 0.0
      %1533 = vmatprep.subr.mxu0 0.0
      %1534 = vmatpush1.msra.mxu0 0.0
      %1535 = vmatprep.subr.mxu0 0.0
      %1536 = vmatpush1.msra.mxu0 0.0
      %1537 = vmatprep.subr.mxu0 0.0
      %1538 = vmatpush1.msra.mxu0 0.0
      %1539 = vmatprep.subr.mxu0 0.0
      %1540 = vmatpush1.msra.mxu0 0.0
      %1541 = vmatprep.subr.mxu0 0.0
      %1542 = vmatpush1.msra.mxu0 0.0
      %1543 = vmatprep.subr.mxu0 0.0
      %1544 = vmatpush1.msra.mxu0 0.0
      %1545 = vmatprep.subr.mxu0 0.0
      %1546 = vmatpush1.msra.mxu0 0.0
      %1547 = vmatprep.subr.mxu0 0.0
      %1548 = vmatpush1.msra.mxu0 0.0
      %1549 = vmatprep.subr.mxu0 0.0
      %1550 = vmatpush1.msra.mxu0 0.0
      %1551 = vmatprep.mubr.f32.mxu0 0.0
      %1552 = vmatmul.mubr.f32.gmra.mrb[0].mxu0 %v1413
      %v1553 = vpop.f32.mrb[0].mxu0
      %v1554 = vadd.f32 0.0, %v1553
      %v1555 = vpop.f32.mrb[0].mxu0
      %1556 = vdwg.mxu0
      %s1557 = scalar_lea.vmem [#allocation3], 72
      %v1558 = vld [vmem:[%s1557] sm:$0xff]
      %v1559 = vld [vmem:[%s1557 + $0x8] sm:$0xff]
      %v1560 = vld [vmem:[%s1557 + $0x10] sm:$0xff]
      %v1561 = vadd.f32 %v1558, %v1483
      %v1562 = vxor.u32 %v1561, 2147483648
      %v1563 = vmul.f32 %v1562, 1.442695
      %v1564 = vpow.pop %v1563
      %v1565 = vadd.f32 %v1564, 1.0
      %v1566 = vrcp.pop %v1565
      %v1567 = vmul.f32 1.0, %v1566
      %v1568 = vadd.f32 %v1559, %v1485
      %v1569 = vxor.u32 %v1568, 2147483648
      %v1570 = vmul.f32 %v1569, 1.442695
      %v1571 = vpow.pop %v1570
      %v1572 = vadd.f32 %v1571, 1.0
      %v1573 = vrcp.pop %v1572
      %v1574 = vmul.f32 1.0, %v1573
      %v1575 = vadd.f32 %v1554, %v908
      %v1576 = vmul.f32 %v1567, %v1575
      %v1577 = vadd.f32 %v1560, %v1576
      %v1578 = vtanh.pop %v1577
      %v1579 = vsub.f32 1.0, %v1574
      %v1580 = vmul.f32 %v1579, %v1578
      %v1581 = vmul.f32 %v1574, %v1413
      %v1582 = vadd.f32 %v1580, %v1581
      %s1583 = scalar_lea.vmem [#allocation4], 24
      %1584 = vst [vmem:[%s1583] sm:$0xff] %v1582
      %1585 = vst [vmem:[#allocation2] sm:$0xff] %v1582
      %p1586 = scmp.eq.s32.totalorder %s29, 1
      // Predicated region
      $region69: #{rec_critic_forward.1} parent=63 // pred_check
        %p1587 = pneg %p1586
      $region70: #{rec_critic_forward.1} parent=63 // pred_check_branch
        %1589 = sbr.rel (%p1587) target = $region72
      $region71: #{rec_critic_forward.1} parent=63 // pred_region
        %1590 = vst [vmem:[%s474] sm:$0xff] %v1582
      $region72: #{rec_critic_forward.1} parent=63 // pred_fallthru
        _
      %v1591 = vld [vmem:[#allocation4] sm:$0xff]
      %v1592 = vld [vmem:[#allocation4 + $0x8] sm:$0xff]
      %v1593 = vld [vmem:[#allocation4 + $0x10] sm:$0xff]
      %v1594 = vld [vmem:[#allocation4 + $0x18] sm:$0xff]
      %v1595 = vld [vmem:[%s8] sm:$0xff]
      %v1596 = vld [vmem:[%s8 + $0x8] sm:$0xff]
      %v1597 = vld [vmem:[%s8 + $0x10] sm:$0xff]
      %v1598 = vld [vmem:[%s8 + $0x18] sm:$0xff]
      %v1599 = vld [vmem:[%s8 + $0x20] sm:$0xff]
      %v1600 = vld [vmem:[%s8 + $0x28] sm:$0xff]
      %v1601 = vld [vmem:[%s8 + $0x30] sm:$0xff]
      %v1602 = vld [vmem:[%s8 + $0x38] sm:$0xff]
      %v1603 = vld [vmem:[%s8 + $0x40] sm:$0xff]
      %v1604 = vld [vmem:[%s8 + $0x48] sm:$0xff]
      %v1605 = vld [vmem:[%s8 + $0x50] sm:$0xff]
      %v1606 = vld [vmem:[%s8 + $0x58] sm:$0xff]
      %v1607 = vld [vmem:[%s8 + $0x60] sm:$0xff]
      %v1608 = vld [vmem:[%s8 + $0x68] sm:$0xff]
      %v1609 = vld [vmem:[%s8 + $0x70] sm:$0xff]
      %v1610 = vld [vmem:[%s8 + $0x78] sm:$0xff]
      %v1611 = vld [vmem:[%s9] sm:$0x1]
      %v1613 = vlaneseq
      %v1614 = vshrl.u32 %v1613, 7
      %v1615 = vsub.s32 0, %v1614
      %v1616 = vrot.slane %v1611, %v1615
      %1618 = vmatprep.subr.mxu0 0.0
      %1619 = vmatpush1.msra.mxu0 %v1595
      %1620 = vmatprep.subr.mxu0 0.0
      %1621 = vmatpush1.msra.mxu0 %v1596
      %1622 = vmatprep.subr.mxu0 0.0
      %1623 = vmatpush1.msra.mxu0 %v1597
      %1624 = vmatprep.subr.mxu0 0.0
      %1625 = vmatpush1.msra.mxu0 %v1598
      %1626 = vmatprep.subr.mxu0 0.0
      %1627 = vmatpush1.msra.mxu0 %v1599
      %1628 = vmatprep.subr.mxu0 0.0
      %1629 = vmatpush1.msra.mxu0 %v1600
      %1630 = vmatprep.subr.mxu0 0.0
      %1631 = vmatpush1.msra.mxu0 %v1601
      %1632 = vmatprep.subr.mxu0 0.0
      %1633 = vmatpush1.msra.mxu0 %v1602
      %1634 = vmatprep.subr.mxu0 0.0
      %1635 = vmatpush1.msra.mxu0 %v1603
      %1636 = vmatprep.subr.mxu0 0.0
      %1637 = vmatpush1.msra.mxu0 %v1604
      %1638 = vmatprep.subr.mxu0 0.0
      %1639 = vmatpush1.msra.mxu0 %v1605
      %1640 = vmatprep.subr.mxu0 0.0
      %1641 = vmatpush1.msra.mxu0 %v1606
      %1642 = vmatprep.subr.mxu0 0.0
      %1643 = vmatpush1.msra.mxu0 %v1607
      %1644 = vmatprep.subr.mxu0 0.0
      %1645 = vmatpush1.msra.mxu0 %v1608
      %1646 = vmatprep.subr.mxu0 0.0
      %1647 = vmatpush1.msra.mxu0 %v1609
      %1648 = vmatprep.subr.mxu0 0.0
      %1649 = vmatpush1.msra.mxu0 %v1610
      %1650 = vmatprep.subr.mxu0 0.0
      %1651 = vmatpush1.msra.mxu0 0.0
      %1652 = vmatprep.subr.mxu0 0.0
      %1653 = vmatpush1.msra.mxu0 0.0
      %1654 = vmatprep.subr.mxu0 0.0
      %1655 = vmatpush1.msra.mxu0 0.0
      %1656 = vmatprep.subr.mxu0 0.0
      %1657 = vmatpush1.msra.mxu0 0.0
      %1658 = vmatprep.subr.mxu0 0.0
      %1659 = vmatpush1.msra.mxu0 0.0
      %1660 = vmatprep.subr.mxu0 0.0
      %1661 = vmatpush1.msra.mxu0 0.0
      %1662 = vmatprep.subr.mxu0 0.0
      %1663 = vmatpush1.msra.mxu0 0.0
      %1664 = vmatprep.subr.mxu0 0.0
      %1665 = vmatpush1.msra.mxu0 0.0
      %1666 = vmatprep.subr.mxu0 0.0
      %1667 = vmatpush1.msra.mxu0 0.0
      %1668 = vmatprep.subr.mxu0 0.0
      %1669 = vmatpush1.msra.mxu0 0.0
      %1670 = vmatprep.subr.mxu0 0.0
      %1671 = vmatpush1.msra.mxu0 0.0
      %1672 = vmatprep.subr.mxu0 0.0
      %1673 = vmatpush1.msra.mxu0 0.0
      %1674 = vmatprep.subr.mxu0 0.0
      %1675 = vmatpush1.msra.mxu0 0.0
      %1676 = vmatprep.subr.mxu0 0.0
      %1677 = vmatpush1.msra.mxu0 0.0
      %1678 = vmatprep.subr.mxu0 0.0
      %1679 = vmatpush1.msra.mxu0 0.0
      %1680 = vmatprep.subr.mxu0 0.0
      %1681 = vmatpush1.msra.mxu0 0.0
      %1682 = vmatprep.mubr.f32.mxu0 0.0
      %1683 = vmatmul.mubr.f32.gmra.mrb[0].mxu0 %v1591
      %v1684 = vpop.f32.mrb[0].mxu0
      %v1685 = vadd.f32 %v1616, %v1684
      %v1686 = vpop.f32.mrb[0].mxu0
      %1687 = vmatprep.mubr.f32.mxu0 0.0
      %1688 = vmatmul.mubr.f32.gmra.mrb[0].mxu0 %v1592
      %v1689 = vpop.f32.mrb[0].mxu0
      %v1690 = vadd.f32 %v1616, %v1689
      %v1691 = vpop.f32.mrb[0].mxu0
      %1692 = vmatprep.mubr.f32.mxu0 0.0
      %1693 = vmatmul.mubr.f32.gmra.mrb[0].mxu0 %v1593
      %v1694 = vpop.f32.mrb[0].mxu0
      %v1695 = vadd.f32 %v1616, %v1694
      %v1696 = vpop.f32.mrb[0].mxu0
      %1697 = vmatprep.mubr.f32.mxu0 0.0
      %1698 = vmatmul.mubr.f32.gmra.mrb[0].mxu0 %v1594
      %v1699 = vpop.f32.mrb[0].mxu0
      %v1700 = vadd.f32 %v1616, %v1699
      %v1701 = vpop.f32.mrb[0].mxu0
      %1702 = vdwg.mxu0
      %vm1703 = vcmp.gt.f32.partialorder %v1685, 0.0
      %vm1704 = vcmp.gt.f32.partialorder %v1690, 0.0
      %vm1705 = vcmp.gt.f32.partialorder %v1695, 0.0
      %vm1706 = vcmp.gt.f32.partialorder %v1700, 0.0
      %v1707 = vmul.f32 %v1685, 0.01
      %v1708 = vmul.f32 %v1690, 0.01
      %v1709 = vmul.f32 %v1695, 0.01
      %v1710 = vmul.f32 %v1700, 0.01
      %v1711 = vsel %vm1703, %v1685, %v1707
      %v1712 = vsel %vm1704, %v1690, %v1708
      %v1713 = vsel %vm1705, %v1695, %v1709
      %v1714 = vsel %vm1706, %v1700, %v1710
      %v1715 = vld [vmem:[%s10] sm:$0x1]
      %v1717 = vlaneseq
      %v1718 = vshrl.u32 %v1717, 7
      %v1719 = vsub.s32 0, %v1718
      %v1720 = vrot.slane %v1715, %v1719
      %v1722 = vmul.f32 %v1711, %v1720
      %v1723 = vmul.f32 %v1712, %v1720
      %v1724 = vmul.f32 %v1713, %v1720
      %v1725 = vmul.f32 %v1714, %v1720
      %1726 = vadd.xlane.f32.xlu0 %v1722
      %v1727 = vpop.xlane.xlu0 %1726
      %1728 = vadd.xlane.f32.xlu0 %v1723
      %v1729 = vpop.xlane.xlu0 %1728
      %1730 = vadd.xlane.f32.xlu0 %v1724
      %v1731 = vpop.xlane.xlu0 %1730
      %1732 = vadd.xlane.f32.xlu0 %v1725
      %v1733 = vpop.xlane.xlu0 %1732
      %v1738 = vlaneseq
      %v1739 = vand.u32 %v1738, 127
      %v1740 = vlaneseq
      %v1741 = vshrl.u32 %v1740, 7
      %v1742 = vsub.s32 %v1739, %v1741
      %v1743 = vrot.slane %v1727, %v1742
      %v1744 = vlaneseq
      %v1745 = vshrl.u32 %v1744, 7
      %v1746 = vsub.s32 %v1739, %v1745
      %v1747 = vrot.slane %v1729, %v1746
      %v1748 = vlaneseq
      %v1749 = vshrl.u32 %v1748, 7
      %v1750 = vsub.s32 %v1739, %v1749
      %v1751 = vrot.slane %v1731, %v1750
      %v1752 = vlaneseq
      %v1753 = vshrl.u32 %v1752, 7
      %v1754 = vsub.s32 %v1739, %v1753
      %v1755 = vrot.slane %v1733, %v1754
      %vm1756 = vcmask 1041409
      %v1757 = vsel %vm1756, %v1747, %v1743
      %vm1758 = vcmask 1042434
      %v1759 = vsel %vm1758, %v1751, %v1757
      %vm1760 = vcmask 1043459
      %v1761 = vsel %vm1760, %v1755, %v1759
      %vm1763 = vcmask 60416
      %1764 = vst.msk [vmem:[%s470] sm:$0xf] %vm1763, %v1761
      %p1765 = scmp.lt.s32.totalorder %s28, 0
      %s1766 = scalar_select %p1765, %s28, 0
      %p1767 = scmp.lt.s32.totalorder %s29, 1
      %s1768 = scalar_select %p1767, %s29, 1
      %s1769 = smul.addr %s1766, 2
      %s1770 = sadd.s32 %s1768, %s1769
      %s1771 = smul.addr %s1770, 4
      %s1772 = scalar_lea.vmem %s11, %s1771
      %p1773 = scmp.lt.s32.totalorder %s28, 0
      %s1774 = scalar_select %p1773, %s28, 0
      %s1775 = smul.addr %s1774, 8
      %s1776 = scalar_lea.vmem %s12, %s1775
      // Predicated region
      $region73: #{rec_critic_forward.1} parent=63 // pred_check
        %p1777 = pneg %p299
      $region74: #{rec_critic_forward.1} parent=63 // pred_check_branch
        %1779 = sbr.rel (%p1777) target = $region76
      $region75: #{rec_critic_forward.1} parent=63 // pred_region
        _
      $region76: #{rec_critic_forward.1} parent=63 // pred_fallthru
        _
      // Predicated region
      $region77: #{rec_critic_forward.1} parent=63 // pred_check
        %p1780 = pneg %p325
      $region78: #{rec_critic_forward.1} parent=63 // pred_check_branch
        %1782 = sbr.rel (%p1780) target = $region80
      $region79: #{rec_critic_forward.1} parent=63 // pred_region
        _
      $region80: #{rec_critic_forward.1} parent=63 // pred_fallthru
        _
      // Predicated region
      $region81: #{rec_critic_forward.1} parent=63 // pred_check
        %p1783 = pneg %p325
      $region82: #{rec_critic_forward.1} parent=63 // pred_check_branch
        %1785 = sbr.rel (%p1783) target = $region84
      $region83: #{rec_critic_forward.1} parent=63 // pred_region
        %p1786 = scmp.lt.s32.totalorder %s28, 0
        %s1787 = scalar_select %p1786, %s28, 0
        %s1788 = smul.addr %s1787, 8
        %s1789 = scalar_lea.vmem %s12, %s1788
      $region84: #{rec_critic_forward.1} parent=63 // pred_fallthru
        _
    $region64: #{rec_critic_forward.1} parent=5 // pred_fallthru
      _
    %p1790 = scmp.le.s32.totalorder 2, %s19
    // Predicated region
    $region85: #{rec_critic_forward.1} parent=5 // pred_check
      %p1791 = pneg %p1790
    $region86: #{rec_critic_forward.1} parent=5 // pred_check_branch
      %1793 = sbr.rel (%p1791) target = $region88
    $region87: #{rec_critic_forward.1} parent=5 // pred_region
      %s1794 = ssub.s32 %s19, 2
      // Predicated region
      $region89: #{rec_critic_forward.1} parent=87 // pred_check
        %p1795 = pneg %p305
      $region90: #{rec_critic_forward.1} parent=87 // pred_check_branch
        %1797 = sbr.rel (%p1795) target = $region92
      $region91: #{rec_critic_forward.1} parent=87 // pred_region
        %p1798 = scmp.lt.s32.totalorder %s30, 0
        %s1799 = scalar_select %p1798, %s30, 0
        %p1800 = scmp.lt.s32.totalorder %s31, 1
        %s1801 = scalar_select %p1800, %s31, 1
        %s1802 = smul.addr %s1799, 2
        %s1803 = sadd.s32 %s1801, %s1802
        %s1804 = smul.addr %s1803, 4
        %s1805 = scalar_lea.vmem %s11, %s1804
      $region92: #{rec_critic_forward.1} parent=87 // pred_fallthru
        _
    $region88: #{rec_critic_forward.1} parent=5 // pred_fallthru
      _
  $region6: #{rec_critic_forward.1} parent=0 // loop_footer
    %s23 = sadd.s32 1, %s19
  $region7: #{rec_critic_forward.1} parent=0 // loop_footer_branch
    %18 = sbr.rel target = $region3
  $region8: #{rec_critic_forward.1} parent=0 // loop_exit
    _

</llo_original>
